<compile_context>
chip_gen: v6e
topology: v6e:2x2x1
jax: 0.10.0
libtpu: 0.0.40
codegen_flags: <defaults>
</compile_context>

<pallas_src>
import math
from functools import partial

import jax
import jax.numpy as jnp
from jax.experimental import pallas as pl
from jax.experimental.pallas import tpu as pltpu


def _encoder_layer_kernel(bb, num_heads, d_head, eps, compute_dtype,
                          x_ref, bias_ref,
                          wq_ref, bq_ref, wk_ref, bk_ref, wv_ref, bv_ref,
                          ln1_g_ref, ln1_b_ref,
                          w1_ref, b1_ref, w2_ref, b2_ref,
                          ln2_g_ref, ln2_b_ref,
                          out_ref, attn_ref):
    H, dh = num_heads, d_head
    S = x_ref.shape[1]
    D = H * dh
    R = bb * S                        # rows fed to the MXU this grid step
    cdt = compute_dtype

    # Fold the batch block into the row dim: (Bb, S, D) -> (Bb*S, D).  Only
    # leading dims collapse (lane dim untouched) -> free relayout.
    x = x_ref[...].reshape(R, D)
    xf = x.astype(jnp.float32)        # residual / LayerNorm path stays f32
    xm = x.astype(cdt)                # MXU operand dtype (bf16 on v6e/v7x)

    # --- Q/K/V projections: (R,D)x(D,D) MXU matmuls, f32 accumulation ---
    q = jnp.dot(xm, wq_ref[...], preferred_element_type=jnp.float32) + bq_ref[...]
    k = jnp.dot(xm, wk_ref[...], preferred_element_type=jnp.float32) + bk_ref[...]
    v = jnp.dot(xm, wv_ref[...], preferred_element_type=jnp.float32) + bv_ref[...]
    # Fold 1/sqrt(d_head) into q: R*D mults once instead of H*S*S on scores.
    q = q * (1.0 / math.sqrt(dh))

    # --- Head split in registers (no VMEM scratch, no masked scratch stores):
    # lane slices + leading-axis stack -> (H, R, dh).
    qc, kc, vc = q.astype(cdt), k.astype(cdt), v.astype(cdt)
    qh = jnp.stack([qc[:, h * dh:(h + 1) * dh] for h in range(H)], axis=0)
    kh = jnp.stack([kc[:, h * dh:(h + 1) * dh] for h in range(H)], axis=0)
    vh = jnp.stack([vc[:, h * dh:(h + 1) * dh] for h in range(H)], axis=0)

    # --- Attention per batch element of the block (heads batched in the dot) ---
    ctx_rows = []
    for b in range(bb):                               # static trip count
        rows = slice(b * S, (b + 1) * S)              # static sublane slice
        scores = jnp.einsum('hqd,hkd->hqk', qh[:, rows, :], kh[:, rows, :],
                            preferred_element_type=jnp.float32)       # (H,S,S)
        # Additive mask bias precomputed in the wrapper: broadcast add only.
        scores = scores + bias_ref[b][None, :, :]
        m = jnp.max(scores, axis=-1, keepdims=True)
        e = jnp.exp(scores - m)
        denom = jnp.sum(e, axis=-1, keepdims=True)
        # EUP reciprocal (frees the VALU); rows sum to 1 within ~1e-3.
        p = e * pl.reciprocal(denom, approx=True)
        attn_ref[b] = p.astype(attn_ref.dtype)
        ctx_h = jnp.einsum('hqk,hkd->hqd', p.astype(cdt), vh[:, rows, :],
                           preferred_element_type=jnp.float32)        # (H,S,dh)
        # Reassemble (S, D) by lane-concatenating heads (registers only).
        ctx_rows.append(jnp.concatenate([ctx_h[h] for h in range(H)], axis=-1))
    ctx = ctx_rows[0] if bb == 1 else jnp.concatenate(ctx_rows, axis=0)  # (R,D)

    # --- Add & Norm 1 ---
    y = ctx + xf
    mu = jnp.mean(y, axis=-1, keepdims=True)
    var = jnp.mean((y - mu) ** 2, axis=-1, keepdims=True)
    y = (y - mu) * jax.lax.rsqrt(var + eps) * ln1_g_ref[...] + ln1_b_ref[...]

    # --- Position-wise FFN ('ff'): Linear -> ReLU -> (dropout) -> Linear ---
    # TODO(synk): dropout (p=0.3) omitted — inference-mode identity.
    h1 = jnp.dot(y.astype(cdt), w1_ref[...],
                 preferred_element_type=jnp.float32) + b1_ref[...]
    h1 = jnp.maximum(h1, 0.0)
    f = jnp.dot(h1.astype(cdt), w2_ref[...],
                preferred_element_type=jnp.float32) + b2_ref[...]

    # --- Add & Norm 2 ---
    z = f + y
    mu2 = jnp.mean(z, axis=-1, keepdims=True)
    var2 = jnp.mean((z - mu2) ** 2, axis=-1, keepdims=True)
    z = (z - mu2) * jax.lax.rsqrt(var2 + eps) * ln2_g_ref[...] + ln2_b_ref[...]

    out_ref[...] = z.reshape(bb, S, D).astype(out_ref.dtype)


def _choose_batch_block(batch, seq, target_rows=128):
    """Largest batch block whose Bb*S hits ~target MXU rows, preferring to keep
    >= 2 grid steps (v7x megacore) when that does not cost the row target."""
    divisors = [d for d in range(1, batch + 1) if batch % d == 0]
    target_bb = max(1, target_rows // max(seq, 1))
    fits = [d for d in divisors if d <= target_bb] or [1]
    bb = max(fits)
    if batch // bb < 2 and batch >= 2:
        alt = [d for d in divisors
               if batch // d >= 2 and (d * seq >= target_rows or bb * seq < target_rows)]
        if alt:
            bb = max(alt)
    return bb


# Exceptions that the single-buffered-weights attempt may legitimately raise if
# pl.Buffered(1) / pipeline_mode is unsupported in this build.  Unrelated
# failures reproduce (and re-raise) from the fallback build, so nothing is
# silently swallowed.
_FALLBACK_ERRORS = (pltpu.LoweringException, NotImplementedError, ValueError,
                    TypeError)
if hasattr(jax.errors, "JaxRuntimeError"):
    _FALLBACK_ERRORS = _FALLBACK_ERRORS + (jax.errors.JaxRuntimeError,)


def transformer_encoder_layer(x, mask, params, num_heads, *, mxu_dtype=None):
    """Fused encoder layer.  `mask` is self_attn_mask: nonzero => masked key.

    mxu_dtype: dtype fed to the MXU (weights + matmul operands).  Defaults to
    x.dtype (exact path); pass jnp.bfloat16 on v6e/v7x for peak MXU throughput
    and halved weight DMA/VMEM.  Softmax/LayerNorm/residual math is always f32.
    """
    B, S, D = x.shape
    F = params["w1"].shape[1]
    H = num_heads
    dh = D // H
    cdt = jnp.dtype(mxu_dtype) if mxu_dtype is not None else jnp.dtype(x.dtype)

    bb = _choose_batch_block(B, S)
    grid = (B // bb,)

    # Mask -> additive bias in the wrapper (free XLA elementwise): the kernel
    # does a broadcast add instead of an O(H*S^2) compare+select per step.
    attn_bias = jnp.where(mask != 0, jnp.float32(-1e9), jnp.float32(0.0))

    # Cast matrix weights to the MXU operand dtype in the wrapper (halves their
    # DMA + VMEM when bf16).  Vector biases / LN params stay f32.
    wq = params["wq"].astype(cdt)
    wk = params["wk"].astype(cdt)
    wv = params["wv"].astype(cdt)
    w1 = params["w1"].astype(cdt)
    w2 = params["w2"].astype(cdt)

    kernel = partial(_encoder_layer_kernel, bb, H, dh, 1e-5, cdt)

    out_specs = (pl.BlockSpec((bb, S, D), lambda i: (i, 0, 0)),
                 pl.BlockSpec((bb, H, S, S), lambda i: (i, 0, 0, 0)))
    # attn is emitted in x.dtype (bf16 inputs -> bf16 attn) to halve writeback.
    out_shape = (jax.ShapeDtypeStruct((B, S, D), x.dtype),
                 jax.ShapeDtypeStruct((B, H, S, S), x.dtype))

    # Explicit scoped-VMEM limit (defaults are only 16/32 MiB); capped at
    # 64 MiB so the request stays within v7x's physical VMEM.
    x_isz = jnp.dtype(x.dtype).itemsize
    w_isz = jnp.dtype(cdt).itemsize
    blk = (bb * S * D * x_isz + bb * S * S * 4
           + bb * S * D * x_isz + bb * H * S * S * x_isz)
    wgt = (3 * D * D + 2 * D * F) * w_isz + (6 * D + F) * 4
    tmp = 4 * (6 * bb * S * D + 4 * bb * H * S * S + 2 * bb * S * F)
    vmem_limit = int(min(64 * 2 ** 20,
                         max(32 * 2 ** 20, 2 * (2 * blk + 2 * wgt + tmp))))

    flops = B * (6 * S * D * D + 4 * S * S * D + 4 * S * D * F)
    transcendentals = B * H * S * S
    bytes_accessed = int(B * S * D * 2 * x_isz + B * S * S * 4
                         + B * H * S * S * x_isz
                         + (3 * D * D + 2 * D * F) * w_isz + (6 * D + F) * 4)
    cost = pl.CostEstimate(flops=flops, transcendentals=transcendentals,
                           bytes_accessed=bytes_accessed)

    args = (x, attn_bias,
            wq, params["bq"], wk, params["bk"], wv, params["bv"],
            params["ln1_g"], params["ln1_b"],
            w1, params["b1"], w2, params["b2"],
            params["ln2_g"], params["ln2_b"])

    def build(single_buffer_weights):
        if single_buffer_weights:
            # Grid-invariant weights: single-buffer so the pipeliner does not
            # double their VMEM footprint (matters at production D/F on v7x).
            def wspec(shape):
                return pl.BlockSpec(shape, lambda i: (0, 0),
                                    pipeline_mode=pl.Buffered(1))
        else:
            def wspec(shape):
                return pl.BlockSpec(shape, lambda i: (0, 0))
        in_specs = [
            pl.BlockSpec((bb, S, D), lambda i: (i, 0, 0)),   # x
            pl.BlockSpec((bb, S, S), lambda i: (i, 0, 0)),   # additive mask bias
            wspec((D, D)), wspec((1, D)),                    # Wq, bq
            wspec((D, D)), wspec((1, D)),                    # Wk, bk
            wspec((D, D)), wspec((1, D)),                    # Wv, bv
            wspec((1, D)), wspec((1, D)),                    # LN1 gamma/beta
            wspec((D, F)), wspec((1, F)),                    # W1, b1
            wspec((F, D)), wspec((1, D)),                    # W2, b2
            wspec((1, D)), wspec((1, D)),                    # LN2 gamma/beta
        ]
        return pl.pallas_call(
            kernel,
            out_shape=out_shape,
            grid=grid,
            in_specs=in_specs,
            out_specs=out_specs,
            compiler_params=pltpu.CompilerParams(
                dimension_semantics=("parallel",),
                vmem_limit_bytes=vmem_limit),
            cost_estimate=cost,
        )(*args)

    try:
        return build(True)
    except _FALLBACK_ERRORS:
        # Only pl.Buffered(1) single-buffering differs between the two builds;
        # if this JAX build rejects it, retry with default double buffering.
        # Any unrelated error re-raises from the second build.
        return build(False)


def _reference(x, mask, params, num_heads):
    """Pure-JAX reference of the same forward pass (for validation)."""
    B, S, D = x.shape
    dh = D // num_heads
    hp = jax.lax.Precision.HIGHEST
    q = jnp.einsum("bsd,df->bsf", x, params["wq"], precision=hp) + params["bq"]
    k = jnp.einsum("bsd,df->bsf", x, params["wk"], precision=hp) + params["bk"]
    v = jnp.einsum("bsd,df->bsf", x, params["wv"], precision=hp) + params["bv"]
    q = q.reshape(B, S, num_heads, dh).transpose(0, 2, 1, 3)
    k = k.reshape(B, S, num_heads, dh).transpose(0, 2, 1, 3)
    v = v.reshape(B, S, num_heads, dh).transpose(0, 2, 1, 3)
    scores = jnp.einsum("bhqd,bhkd->bhqk", q, k, precision=hp) / math.sqrt(dh)
    scores = jnp.where(mask[:, None, :, :] != 0, -1e9, scores)
    attn = jax.nn.softmax(scores, axis=-1)
    ctx = jnp.einsum("bhqk,bhkd->bhqd", attn, v, precision=hp)
    ctx = ctx.transpose(0, 2, 1, 3).reshape(B, S, D)

    def ln(t, g, b):
        mu = jnp.mean(t, axis=-1, keepdims=True)
        var = jnp.mean((t - mu) ** 2, axis=-1, keepdims=True)
        return (t - mu) * jax.lax.rsqrt(var + 1e-5) * g + b

    y = ln(ctx + x, params["ln1_g"], params["ln1_b"])
    h1 = jnp.maximum(jnp.einsum("bsd,df->bsf", y, params["w1"], precision=hp)
                     + params["b1"], 0.0)
    f = jnp.einsum("bsf,fd->bsd", h1, params["w2"], precision=hp) + params["b2"]
    z = ln(f + y, params["ln2_g"], params["ln2_b"])
    return z, attn


if __name__ == "__main__":
    # Small shapes consistent with the module: (batch, seq, d_model)
    B, S, D, H, F = 2, 8, 32, 4, 64

    key = jax.random.PRNGKey(0)
    keys = jax.random.split(key, 6)
    scale = 0.05
    params = {
        "wq": scale * jax.random.normal(keys[0], (D, D), jnp.float32),
        "bq": jnp.zeros((1, D), jnp.float32),
        "wk": scale * jax.random.normal(keys[1], (D, D), jnp.float32),
        "bk": jnp.zeros((1, D), jnp.float32),
        "wv": scale * jax.random.normal(keys[2], (D, D), jnp.float32),
        "bv": jnp.zeros((1, D), jnp.float32),
        "ln1_g": jnp.ones((1, D), jnp.float32),
        "ln1_b": jnp.zeros((1, D), jnp.float32),
        "w1": scale * jax.random.normal(keys[3], (D, F), jnp.float32),
        "b1": 0.01 * jnp.ones((1, F), jnp.float32),
        "w2": scale * jax.random.normal(keys[4], (F, D), jnp.float32),
        "b2": 0.01 * jnp.ones((1, D), jnp.float32),
        "ln2_g": jnp.ones((1, D), jnp.float32),
        "ln2_b": jnp.zeros((1, D), jnp.float32),
    }

    x = jax.random.normal(keys[5], (B, S, D), jnp.float32)
    # self_attn_mask: nonzero => masked (key padding). Batch 1 has last 2 keys padded.
    valid = jnp.array([S, S - 2])
    key_mask = (jnp.arange(S)[None, :] >= valid[:, None]).astype(jnp.float32)  # (B, S)
    mask = jnp.broadcast_to(key_mask[:, None, :], (B, S, S)).astype(jnp.float32)

    # Exact (f32 MXU-operand) path: preserves module numerics.
    out, attn = transformer_encoder_layer(x, mask, params, H)
    jax.block_until_ready((out, attn))

    ref_out, ref_attn = _reference(x, mask, params, H)
    assert out.shape == (B, S, D) and attn.shape == (B, H, S, S)
    assert jnp.allclose(out, ref_out, rtol=5e-3, atol=5e-3), "output mismatch"
    assert jnp.allclose(attn, ref_attn, rtol=5e-3, atol=5e-3), "attn mismatch"

    # bf16 MXU-operand path (the v6e/v7x production setting); looser tolerance.
    out_bf, attn_bf = transformer_encoder_layer(x, mask, params, H,
                                                mxu_dtype=jnp.bfloat16)
    jax.block_until_ready((out_bf, attn_bf))
    assert jnp.allclose(out_bf, ref_out, rtol=3e-2, atol=3e-2), "bf16 output mismatch"
    assert jnp.allclose(attn_bf, ref_attn, rtol=3e-2, atol=3e-2), "bf16 attn mismatch"

    print("KERNEL_OK")
</pallas_src>

<mosaic_0001>
module attributes {stable_mosaic.version = 11 : i64} {
  func.func @_encoder_layer_kernel(%arg0: i32, %arg1: memref<1x8x32xf32, #tpu.memory_space<vmem>>, %arg2: memref<1x8x8xf32, #tpu.memory_space<vmem>>, %arg3: memref<32x32xf32, #tpu.memory_space<vmem>>, %arg4: memref<1x32xf32, #tpu.memory_space<vmem>>, %arg5: memref<32x32xf32, #tpu.memory_space<vmem>>, %arg6: memref<1x32xf32, #tpu.memory_space<vmem>>, %arg7: memref<32x32xf32, #tpu.memory_space<vmem>>, %arg8: memref<1x32xf32, #tpu.memory_space<vmem>>, %arg9: memref<1x32xf32, #tpu.memory_space<vmem>>, %arg10: memref<1x32xf32, #tpu.memory_space<vmem>>, %arg11: memref<32x64xf32, #tpu.memory_space<vmem>>, %arg12: memref<1x64xf32, #tpu.memory_space<vmem>>, %arg13: memref<64x32xf32, #tpu.memory_space<vmem>>, %arg14: memref<1x32xf32, #tpu.memory_space<vmem>>, %arg15: memref<1x32xf32, #tpu.memory_space<vmem>>, %arg16: memref<1x32xf32, #tpu.memory_space<vmem>>, %arg17: memref<1x8x32xf32, #tpu.memory_space<vmem>>, %arg18: memref<1x4x8x8xf32, #tpu.memory_space<vmem>>) attributes {dimension_semantics = [#tpu.dimension_semantics<parallel>], iteration_bounds = array<i64: 2>, scalar_prefetch = 0 : i64, scratch_operands = 0 : i64, tpu.core_type = #tpu.core_type<tc>, window_params = [{transform_indices = @transform_0, window_bounds = array<i64: 1, 8, 32>}, {transform_indices = @transform_1, window_bounds = array<i64: 1, 8, 8>}, {pipeline_mode = #tpu.pipeline_mode<synchronous>, transform_indices = @transform_2, window_bounds = array<i64: 32, 32>}, {pipeline_mode = #tpu.pipeline_mode<synchronous>, transform_indices = @transform_3, window_bounds = array<i64: 1, 32>}, {pipeline_mode = #tpu.pipeline_mode<synchronous>, transform_indices = @transform_4, window_bounds = array<i64: 32, 32>}, {pipeline_mode = #tpu.pipeline_mode<synchronous>, transform_indices = @transform_5, window_bounds = array<i64: 1, 32>}, {pipeline_mode = #tpu.pipeline_mode<synchronous>, transform_indices = @transform_6, window_bounds = array<i64: 32, 32>}, {pipeline_mode = #tpu.pipeline_mode<synchronous>, transform_indices = @transform_7, window_bounds = array<i64: 1, 32>}, {pipeline_mode = #tpu.pipeline_mode<synchronous>, transform_indices = @transform_8, window_bounds = array<i64: 1, 32>}, {pipeline_mode = #tpu.pipeline_mode<synchronous>, transform_indices = @transform_9, window_bounds = array<i64: 1, 32>}, {pipeline_mode = #tpu.pipeline_mode<synchronous>, transform_indices = @transform_10, window_bounds = array<i64: 32, 64>}, {pipeline_mode = #tpu.pipeline_mode<synchronous>, transform_indices = @transform_11, window_bounds = array<i64: 1, 64>}, {pipeline_mode = #tpu.pipeline_mode<synchronous>, transform_indices = @transform_12, window_bounds = array<i64: 64, 32>}, {pipeline_mode = #tpu.pipeline_mode<synchronous>, transform_indices = @transform_13, window_bounds = array<i64: 1, 32>}, {pipeline_mode = #tpu.pipeline_mode<synchronous>, transform_indices = @transform_14, window_bounds = array<i64: 1, 32>}, {pipeline_mode = #tpu.pipeline_mode<synchronous>, transform_indices = @transform_15, window_bounds = array<i64: 1, 32>}, {transform_indices = @transform_16, window_bounds = array<i64: 1, 8, 32>}, {transform_indices = @transform_17, window_bounds = array<i64: 1, 4, 8, 8>}]} {
    %c0 = arith.constant 0 : index
    %c0_0 = arith.constant 0 : index
    %c0_1 = arith.constant 0 : index
    %0 = vector.load %arg1[%c0, %c0_0, %c0_1] : memref<1x8x32xf32, #tpu.memory_space<vmem>>, vector<1x8x32xf32>
    %1 = vector.shape_cast %0 : vector<1x8x32xf32> to vector<8x32xf32>
    %c0_2 = arith.constant 0 : index
    %c0_3 = arith.constant 0 : index
    %2 = vector.load %arg3[%c0_2, %c0_3] : memref<32x32xf32, #tpu.memory_space<vmem>>, vector<32x32xf32>
    %cst = arith.constant dense<0.000000e+00> : vector<8x32xf32>
    %3 = tpu.matmul %1, %2, %cst {dimension_numbers = #tpu.dot_dimension_numbers<[1], [0], [0], [1], [0, 0, 1, 1], [], []>} : vector<8x32xf32>, vector<32x32xf32>, vector<8x32xf32> -> vector<8x32xf32>
    %c0_4 = arith.constant 0 : index
    %c0_5 = arith.constant 0 : index
    %4 = vector.load %arg4[%c0_4, %c0_5] : memref<1x32xf32, #tpu.memory_space<vmem>>, vector<1x32xf32>
    %5 = vector.broadcast %4 : vector<1x32xf32> to vector<8x32xf32>
    %6 = arith.addf %3, %5 : vector<8x32xf32>
    %c0_6 = arith.constant 0 : index
    %c0_7 = arith.constant 0 : index
    %7 = vector.load %arg5[%c0_6, %c0_7] : memref<32x32xf32, #tpu.memory_space<vmem>>, vector<32x32xf32>
    %cst_8 = arith.constant dense<0.000000e+00> : vector<8x32xf32>
    %8 = tpu.matmul %1, %7, %cst_8 {dimension_numbers = #tpu.dot_dimension_numbers<[1], [0], [0], [1], [0, 0, 1, 1], [], []>} : vector<8x32xf32>, vector<32x32xf32>, vector<8x32xf32> -> vector<8x32xf32>
    %c0_9 = arith.constant 0 : index
    %c0_10 = arith.constant 0 : index
    %9 = vector.load %arg6[%c0_9, %c0_10] : memref<1x32xf32, #tpu.memory_space<vmem>>, vector<1x32xf32>
    %10 = vector.broadcast %9 : vector<1x32xf32> to vector<8x32xf32>
    %11 = arith.addf %8, %10 : vector<8x32xf32>
    %c0_11 = arith.constant 0 : index
    %c0_12 = arith.constant 0 : index
    %12 = vector.load %arg7[%c0_11, %c0_12] : memref<32x32xf32, #tpu.memory_space<vmem>>, vector<32x32xf32>
    %cst_13 = arith.constant dense<0.000000e+00> : vector<8x32xf32>
    %13 = tpu.matmul %1, %12, %cst_13 {dimension_numbers = #tpu.dot_dimension_numbers<[1], [0], [0], [1], [0, 0, 1, 1], [], []>} : vector<8x32xf32>, vector<32x32xf32>, vector<8x32xf32> -> vector<8x32xf32>
    %c0_14 = arith.constant 0 : index
    %c0_15 = arith.constant 0 : index
    %14 = vector.load %arg8[%c0_14, %c0_15] : memref<1x32xf32, #tpu.memory_space<vmem>>, vector<1x32xf32>
    %15 = vector.broadcast %14 : vector<1x32xf32> to vector<8x32xf32>
    %16 = arith.addf %13, %15 : vector<8x32xf32>
    %cst_16 = arith.constant 0.353553385 : f32
    %17 = vector.broadcast %cst_16 : f32 to vector<8x32xf32>
    %18 = arith.mulf %6, %17 : vector<8x32xf32>
    %19 = vector.extract_strided_slice %18 {offsets = [0, 0], sizes = [8, 8], strides = [1, 1]} : vector<8x32xf32> to vector<8x8xf32>
    %20 = vector.extract_strided_slice %18 {offsets = [0, 8], sizes = [8, 8], strides = [1, 1]} : vector<8x32xf32> to vector<8x8xf32>
    %21 = vector.extract_strided_slice %18 {offsets = [0, 16], sizes = [8, 8], strides = [1, 1]} : vector<8x32xf32> to vector<8x8xf32>
    %22 = vector.extract_strided_slice %18 {offsets = [0, 24], sizes = [8, 8], strides = [1, 1]} : vector<8x32xf32> to vector<8x8xf32>
    %23 = vector.shape_cast %19 : vector<8x8xf32> to vector<1x8x8xf32>
    %24 = vector.shape_cast %20 : vector<8x8xf32> to vector<1x8x8xf32>
    %25 = vector.shape_cast %21 : vector<8x8xf32> to vector<1x8x8xf32>
    %26 = vector.shape_cast %22 : vector<8x8xf32> to vector<1x8x8xf32>
    %27 = tpu.concatenate %23, %24, %25, %26 in 0 : vector<1x8x8xf32>, vector<1x8x8xf32>, vector<1x8x8xf32>, vector<1x8x8xf32> -> vector<4x8x8xf32>
    %28 = vector.extract_strided_slice %11 {offsets = [0, 0], sizes = [8, 8], strides = [1, 1]} : vector<8x32xf32> to vector<8x8xf32>
    %29 = vector.extract_strided_slice %11 {offsets = [0, 8], sizes = [8, 8], strides = [1, 1]} : vector<8x32xf32> to vector<8x8xf32>
    %30 = vector.extract_strided_slice %11 {offsets = [0, 16], sizes = [8, 8], strides = [1, 1]} : vector<8x32xf32> to vector<8x8xf32>
    %31 = vector.extract_strided_slice %11 {offsets = [0, 24], sizes = [8, 8], strides = [1, 1]} : vector<8x32xf32> to vector<8x8xf32>
    %32 = vector.shape_cast %28 : vector<8x8xf32> to vector<1x8x8xf32>
    %33 = vector.shape_cast %29 : vector<8x8xf32> to vector<1x8x8xf32>
    %34 = vector.shape_cast %30 : vector<8x8xf32> to vector<1x8x8xf32>
    %35 = vector.shape_cast %31 : vector<8x8xf32> to vector<1x8x8xf32>
    %36 = tpu.concatenate %32, %33, %34, %35 in 0 : vector<1x8x8xf32>, vector<1x8x8xf32>, vector<1x8x8xf32>, vector<1x8x8xf32> -> vector<4x8x8xf32>
    %37 = vector.extract_strided_slice %16 {offsets = [0, 0], sizes = [8, 8], strides = [1, 1]} : vector<8x32xf32> to vector<8x8xf32>
    %38 = vector.extract_strided_slice %16 {offsets = [0, 8], sizes = [8, 8], strides = [1, 1]} : vector<8x32xf32> to vector<8x8xf32>
    %39 = vector.extract_strided_slice %16 {offsets = [0, 16], sizes = [8, 8], strides = [1, 1]} : vector<8x32xf32> to vector<8x8xf32>
    %40 = vector.extract_strided_slice %16 {offsets = [0, 24], sizes = [8, 8], strides = [1, 1]} : vector<8x32xf32> to vector<8x8xf32>
    %41 = vector.shape_cast %37 : vector<8x8xf32> to vector<1x8x8xf32>
    %42 = vector.shape_cast %38 : vector<8x8xf32> to vector<1x8x8xf32>
    %43 = vector.shape_cast %39 : vector<8x8xf32> to vector<1x8x8xf32>
    %44 = vector.shape_cast %40 : vector<8x8xf32> to vector<1x8x8xf32>
    %45 = tpu.concatenate %41, %42, %43, %44 in 0 : vector<1x8x8xf32>, vector<1x8x8xf32>, vector<1x8x8xf32>, vector<1x8x8xf32> -> vector<4x8x8xf32>
    "tpu.trace_start"() <{level = 10 : i32, message = "hqd,hkd->hqk"}> : () -> ()
    %cst_17 = arith.constant dense<0.000000e+00> : vector<4x8x8xf32>
    %46 = tpu.matmul %27, %36, %cst_17 {dimension_numbers = #tpu.dot_dimension_numbers<[2], [2], [1], [1], [0, 0, 0, 1, 1, 1], [0], [0]>} : vector<4x8x8xf32>, vector<4x8x8xf32>, vector<4x8x8xf32> -> vector<4x8x8xf32>
    "tpu.trace_stop"() : () -> ()
    %c0_18 = arith.constant 0 : index
    %c0_19 = arith.constant 0 : index
    %c0_20 = arith.constant 0 : index
    %47 = vector.load %arg2[%c0_18, %c0_19, %c0_20] : memref<1x8x8xf32, #tpu.memory_space<vmem>>, vector<1x8x8xf32>
    %48 = vector.shape_cast %47 : vector<1x8x8xf32> to vector<8x8xf32>
    %49 = vector.shape_cast %48 : vector<8x8xf32> to vector<1x8x8xf32>
    %50 = vector.broadcast %49 : vector<1x8x8xf32> to vector<4x8x8xf32>
    %51 = arith.addf %46, %50 : vector<4x8x8xf32>
    %cst_21 = arith.constant dense<0xFF800000> : vector<4x8xf32>
    %52 = vector.multi_reduction <maximumf>, %51, %cst_21 [2] : vector<4x8x8xf32> to vector<4x8xf32>
    %53 = vector.shape_cast %52 : vector<4x8xf32> to vector<4x8x1xf32>
    %54 = vector.broadcast %53 : vector<4x8x1xf32> to vector<4x8x8xf32>
    %55 = arith.subf %51, %54 : vector<4x8x8xf32>
    %56 = math.exp %55 : vector<4x8x8xf32>
    %cst_22 = arith.constant dense<0.000000e+00> : vector<4x8xf32>
    %57 = vector.multi_reduction <add>, %56, %cst_22 [2] : vector<4x8x8xf32> to vector<4x8xf32>
    %58 = vector.shape_cast %57 : vector<4x8xf32> to vector<4x8x1xf32>
    %59 = tpu.reciprocal %58 {approx = true} : vector<4x8x1xf32> -> vector<4x8x1xf32>
    %60 = vector.broadcast %59 : vector<4x8x1xf32> to vector<4x8x8xf32>
    %61 = arith.mulf %56, %60 : vector<4x8x8xf32>
    %c0_23 = arith.constant 0 : index
    %c0_24 = arith.constant 0 : index
    %c0_25 = arith.constant 0 : index
    %c0_26 = arith.constant 0 : index
    %62 = vector.load %arg18[%c0_23, %c0_24, %c0_25, %c0_26] : memref<1x4x8x8xf32, #tpu.memory_space<vmem>>, vector<1x4x8x8xf32>
    %63 = vector.shape_cast %62 : vector<1x4x8x8xf32> to vector<4x8x8xf32>
    %64 = vector.shape_cast %61 : vector<4x8x8xf32> to vector<1x4x8x8xf32>
    tpu.vector_store %arg18[%c0_23, %c0_24, %c0_25, %c0_26], %64 {strides = array<i32>} : memref<1x4x8x8xf32, #tpu.memory_space<vmem>>, vector<1x4x8x8xf32>,
    "tpu.trace_start"() <{level = 10 : i32, message = "hqk,hkd->hqd"}> : () -> ()
    %cst_27 = arith.constant dense<0.000000e+00> : vector<4x8x8xf32>
    %65 = tpu.matmul %61, %45, %cst_27 {dimension_numbers = #tpu.dot_dimension_numbers<[2], [1], [1], [2], [0, 0, 0, 1, 1, 2], [0], [0]>} : vector<4x8x8xf32>, vector<4x8x8xf32>, vector<4x8x8xf32> -> vector<4x8x8xf32>
    "tpu.trace_stop"() : () -> ()
    %66 = vector.extract_strided_slice %65 {offsets = [0, 0, 0], sizes = [1, 8, 8], strides = [1, 1, 1]} : vector<4x8x8xf32> to vector<1x8x8xf32>
    %67 = vector.shape_cast %66 : vector<1x8x8xf32> to vector<8x8xf32>
    %68 = vector.extract_strided_slice %65 {offsets = [1, 0, 0], sizes = [1, 8, 8], strides = [1, 1, 1]} : vector<4x8x8xf32> to vector<1x8x8xf32>
    %69 = vector.shape_cast %68 : vector<1x8x8xf32> to vector<8x8xf32>
    %70 = vector.extract_strided_slice %65 {offsets = [2, 0, 0], sizes = [1, 8, 8], strides = [1, 1, 1]} : vector<4x8x8xf32> to vector<1x8x8xf32>
    %71 = vector.shape_cast %70 : vector<1x8x8xf32> to vector<8x8xf32>
    %72 = vector.extract_strided_slice %65 {offsets = [3, 0, 0], sizes = [1, 8, 8], strides = [1, 1, 1]} : vector<4x8x8xf32> to vector<1x8x8xf32>
    %73 = vector.shape_cast %72 : vector<1x8x8xf32> to vector<8x8xf32>
    %74 = tpu.concatenate %67, %69, %71, %73 in 1 : vector<8x8xf32>, vector<8x8xf32>, vector<8x8xf32>, vector<8x8xf32> -> vector<8x32xf32>
    %75 = arith.addf %74, %1 : vector<8x32xf32>
    %cst_28 = arith.constant dense<0.000000e+00> : vector<8xf32>
    %76 = vector.multi_reduction <add>, %75, %cst_28 [1] : vector<8x32xf32> to vector<8xf32>
    %77 = vector.shape_cast %76 : vector<8xf32> to vector<8x1xf32>
    %cst_29 = arith.constant 3.200000e+01 : f32
    %78 = vector.broadcast %cst_29 : f32 to vector<8x1xf32>
    %79 = arith.divf %77, %78 : vector<8x1xf32>
    %80 = vector.broadcast %79 : vector<8x1xf32> to vector<8x32xf32>
    %81 = arith.subf %75, %80 : vector<8x32xf32>
    %82 = arith.mulf %81, %81 : vector<8x32xf32>
    %cst_30 = arith.constant dense<0.000000e+00> : vector<8xf32>
    %83 = vector.multi_reduction <add>, %82, %cst_30 [1] : vector<8x32xf32> to vector<8xf32>
    %84 = vector.shape_cast %83 : vector<8xf32> to vector<8x1xf32>
    %cst_31 = arith.constant 3.200000e+01 : f32
    %85 = vector.broadcast %cst_31 : f32 to vector<8x1xf32>
    %86 = arith.divf %84, %85 : vector<8x1xf32>
    %87 = vector.broadcast %79 : vector<8x1xf32> to vector<8x32xf32>
    %88 = arith.subf %75, %87 : vector<8x32xf32>
    %cst_32 = arith.constant 9.99999974E-6 : f32
    %89 = vector.broadcast %cst_32 : f32 to vector<8x1xf32>
    %90 = arith.addf %86, %89 : vector<8x1xf32>
    %91 = math.rsqrt %90 : vector<8x1xf32>
    %92 = vector.broadcast %91 : vector<8x1xf32> to vector<8x32xf32>
    %93 = arith.mulf %88, %92 : vector<8x32xf32>
    %c0_33 = arith.constant 0 : index
    %c0_34 = arith.constant 0 : index
    %94 = vector.load %arg9[%c0_33, %c0_34] : memref<1x32xf32, #tpu.memory_space<vmem>>, vector<1x32xf32>
    %95 = vector.broadcast %94 : vector<1x32xf32> to vector<8x32xf32>
    %96 = arith.mulf %93, %95 : vector<8x32xf32>
    %c0_35 = arith.constant 0 : index
    %c0_36 = arith.constant 0 : index
    %97 = vector.load %arg10[%c0_35, %c0_36] : memref<1x32xf32, #tpu.memory_space<vmem>>, vector<1x32xf32>
    %98 = vector.broadcast %97 : vector<1x32xf32> to vector<8x32xf32>
    %99 = arith.addf %96, %98 : vector<8x32xf32>
    %c0_37 = arith.constant 0 : index
    %c0_38 = arith.constant 0 : index
    %100 = vector.load %arg11[%c0_37, %c0_38] : memref<32x64xf32, #tpu.memory_space<vmem>>, vector<32x64xf32>
    %cst_39 = arith.constant dense<0.000000e+00> : vector<8x64xf32>
    %101 = tpu.matmul %99, %100, %cst_39 {dimension_numbers = #tpu.dot_dimension_numbers<[1], [0], [0], [1], [0, 0, 1, 1], [], []>} : vector<8x32xf32>, vector<32x64xf32>, vector<8x64xf32> -> vector<8x64xf32>
    %c0_40 = arith.constant 0 : index
    %c0_41 = arith.constant 0 : index
    %102 = vector.load %arg12[%c0_40, %c0_41] : memref<1x64xf32, #tpu.memory_space<vmem>>, vector<1x64xf32>
    %103 = vector.broadcast %102 : vector<1x64xf32> to vector<8x64xf32>
    %104 = arith.addf %101, %103 : vector<8x64xf32>
    %cst_42 = arith.constant 0.000000e+00 : f32
    %105 = vector.broadcast %cst_42 : f32 to vector<8x64xf32>
    %106 = arith.maximumf %104, %105 : vector<8x64xf32>
    %c0_43 = arith.constant 0 : index
    %c0_44 = arith.constant 0 : index
    %107 = vector.load %arg13[%c0_43, %c0_44] : memref<64x32xf32, #tpu.memory_space<vmem>>, vector<64x32xf32>
    %cst_45 = arith.constant dense<0.000000e+00> : vector<8x32xf32>
    %108 = tpu.matmul %106, %107, %cst_45 {dimension_numbers = #tpu.dot_dimension_numbers<[1], [0], [0], [1], [0, 0, 1, 1], [], []>} : vector<8x64xf32>, vector<64x32xf32>, vector<8x32xf32> -> vector<8x32xf32>
    %c0_46 = arith.constant 0 : index
    %c0_47 = arith.constant 0 : index
    %109 = vector.load %arg14[%c0_46, %c0_47] : memref<1x32xf32, #tpu.memory_space<vmem>>, vector<1x32xf32>
    %110 = vector.broadcast %109 : vector<1x32xf32> to vector<8x32xf32>
    %111 = arith.addf %108, %110 : vector<8x32xf32>
    %112 = arith.addf %111, %99 : vector<8x32xf32>
    %cst_48 = arith.constant dense<0.000000e+00> : vector<8xf32>
    %113 = vector.multi_reduction <add>, %112, %cst_48 [1] : vector<8x32xf32> to vector<8xf32>
    %114 = vector.shape_cast %113 : vector<8xf32> to vector<8x1xf32>
    %cst_49 = arith.constant 3.200000e+01 : f32
    %115 = vector.broadcast %cst_49 : f32 to vector<8x1xf32>
    %116 = arith.divf %114, %115 : vector<8x1xf32>
    %117 = vector.broadcast %116 : vector<8x1xf32> to vector<8x32xf32>
    %118 = arith.subf %112, %117 : vector<8x32xf32>
    %119 = arith.mulf %118, %118 : vector<8x32xf32>
    %cst_50 = arith.constant dense<0.000000e+00> : vector<8xf32>
    %120 = vector.multi_reduction <add>, %119, %cst_50 [1] : vector<8x32xf32> to vector<8xf32>
    %121 = vector.shape_cast %120 : vector<8xf32> to vector<8x1xf32>
    %cst_51 = arith.constant 3.200000e+01 : f32
    %122 = vector.broadcast %cst_51 : f32 to vector<8x1xf32>
    %123 = arith.divf %121, %122 : vector<8x1xf32>
    %124 = vector.broadcast %116 : vector<8x1xf32> to vector<8x32xf32>
    %125 = arith.subf %112, %124 : vector<8x32xf32>
    %cst_52 = arith.constant 9.99999974E-6 : f32
    %126 = vector.broadcast %cst_52 : f32 to vector<8x1xf32>
    %127 = arith.addf %123, %126 : vector<8x1xf32>
    %128 = math.rsqrt %127 : vector<8x1xf32>
    %129 = vector.broadcast %128 : vector<8x1xf32> to vector<8x32xf32>
    %130 = arith.mulf %125, %129 : vector<8x32xf32>
    %c0_53 = arith.constant 0 : index
    %c0_54 = arith.constant 0 : index
    %131 = vector.load %arg15[%c0_53, %c0_54] : memref<1x32xf32, #tpu.memory_space<vmem>>, vector<1x32xf32>
    %132 = vector.broadcast %131 : vector<1x32xf32> to vector<8x32xf32>
    %133 = arith.mulf %130, %132 : vector<8x32xf32>
    %c0_55 = arith.constant 0 : index
    %c0_56 = arith.constant 0 : index
    %134 = vector.load %arg16[%c0_55, %c0_56] : memref<1x32xf32, #tpu.memory_space<vmem>>, vector<1x32xf32>
    %135 = vector.broadcast %134 : vector<1x32xf32> to vector<8x32xf32>
    %136 = arith.addf %133, %135 : vector<8x32xf32>
    %137 = vector.shape_cast %136 : vector<8x32xf32> to vector<1x8x32xf32>
    %c0_57 = arith.constant 0 : index
    %c0_58 = arith.constant 0 : index
    %c0_59 = arith.constant 0 : index
    %138 = vector.load %arg17[%c0_57, %c0_58, %c0_59] : memref<1x8x32xf32, #tpu.memory_space<vmem>>, vector<1x8x32xf32>
    tpu.vector_store %arg17[%c0_57, %c0_58, %c0_59], %137 {strides = array<i32>} : memref<1x8x32xf32, #tpu.memory_space<vmem>>, vector<1x8x32xf32>,
    return
  }
  func.func @transform_0(%arg0: i32) -> (i32, i32, i32) {
    %c0_i32 = arith.constant 0 : i32
    %c0_i32_0 = arith.constant 0 : i32
    %c0_i32_1 = arith.constant 0 : i32
    return %arg0, %c0_i32, %c0_i32_0 : i32, i32, i32
  }
  func.func @transform_1(%arg0: i32) -> (i32, i32, i32) {
    %c0_i32 = arith.constant 0 : i32
    %c0_i32_0 = arith.constant 0 : i32
    %c0_i32_1 = arith.constant 0 : i32
    return %arg0, %c0_i32, %c0_i32_0 : i32, i32, i32
  }
  func.func @transform_2(%arg0: i32) -> (i32, i32) {
    %c0_i32 = arith.constant 0 : i32
    %c0_i32_0 = arith.constant 0 : i32
    %c0_i32_1 = arith.constant 0 : i32
    return %c0_i32, %c0_i32_0 : i32, i32
  }
  func.func @transform_3(%arg0: i32) -> (i32, i32) {
    %c0_i32 = arith.constant 0 : i32
    %c0_i32_0 = arith.constant 0 : i32
    %c0_i32_1 = arith.constant 0 : i32
    return %c0_i32, %c0_i32_0 : i32, i32
  }
  func.func @transform_4(%arg0: i32) -> (i32, i32) {
    %c0_i32 = arith.constant 0 : i32
    %c0_i32_0 = arith.constant 0 : i32
    %c0_i32_1 = arith.constant 0 : i32
    return %c0_i32, %c0_i32_0 : i32, i32
  }
  func.func @transform_5(%arg0: i32) -> (i32, i32) {
    %c0_i32 = arith.constant 0 : i32
    %c0_i32_0 = arith.constant 0 : i32
    %c0_i32_1 = arith.constant 0 : i32
    return %c0_i32, %c0_i32_0 : i32, i32
  }
  func.func @transform_6(%arg0: i32) -> (i32, i32) {
    %c0_i32 = arith.constant 0 : i32
    %c0_i32_0 = arith.constant 0 : i32
    %c0_i32_1 = arith.constant 0 : i32
    return %c0_i32, %c0_i32_0 : i32, i32
  }
  func.func @transform_7(%arg0: i32) -> (i32, i32) {
    %c0_i32 = arith.constant 0 : i32
    %c0_i32_0 = arith.constant 0 : i32
    %c0_i32_1 = arith.constant 0 : i32
    return %c0_i32, %c0_i32_0 : i32, i32
  }
  func.func @transform_8(%arg0: i32) -> (i32, i32) {
    %c0_i32 = arith.constant 0 : i32
    %c0_i32_0 = arith.constant 0 : i32
    %c0_i32_1 = arith.constant 0 : i32
    return %c0_i32, %c0_i32_0 : i32, i32
  }
  func.func @transform_9(%arg0: i32) -> (i32, i32) {
    %c0_i32 = arith.constant 0 : i32
    %c0_i32_0 = arith.constant 0 : i32
    %c0_i32_1 = arith.constant 0 : i32
    return %c0_i32, %c0_i32_0 : i32, i32
  }
  func.func @transform_10(%arg0: i32) -> (i32, i32) {
    %c0_i32 = arith.constant 0 : i32
    %c0_i32_0 = arith.constant 0 : i32
    %c0_i32_1 = arith.constant 0 : i32
    return %c0_i32, %c0_i32_0 : i32, i32
  }
  func.func @transform_11(%arg0: i32) -> (i32, i32) {
    %c0_i32 = arith.constant 0 : i32
    %c0_i32_0 = arith.constant 0 : i32
    %c0_i32_1 = arith.constant 0 : i32
    return %c0_i32, %c0_i32_0 : i32, i32
  }
  func.func @transform_12(%arg0: i32) -> (i32, i32) {
    %c0_i32 = arith.constant 0 : i32
    %c0_i32_0 = arith.constant 0 : i32
    %c0_i32_1 = arith.constant 0 : i32
    return %c0_i32, %c0_i32_0 : i32, i32
  }
  func.func @transform_13(%arg0: i32) -> (i32, i32) {
    %c0_i32 = arith.constant 0 : i32
    %c0_i32_0 = arith.constant 0 : i32
    %c0_i32_1 = arith.constant 0 : i32
    return %c0_i32, %c0_i32_0 : i32, i32
  }
  func.func @transform_14(%arg0: i32) -> (i32, i32) {
    %c0_i32 = arith.constant 0 : i32
    %c0_i32_0 = arith.constant 0 : i32
    %c0_i32_1 = arith.constant 0 : i32
    return %c0_i32, %c0_i32_0 : i32, i32
  }
  func.func @transform_15(%arg0: i32) -> (i32, i32) {
    %c0_i32 = arith.constant 0 : i32
    %c0_i32_0 = arith.constant 0 : i32
    %c0_i32_1 = arith.constant 0 : i32
    return %c0_i32, %c0_i32_0 : i32, i32
  }
  func.func @transform_16(%arg0: i32) -> (i32, i32, i32) {
    %c0_i32 = arith.constant 0 : i32
    %c0_i32_0 = arith.constant 0 : i32
    %c0_i32_1 = arith.constant 0 : i32
    return %arg0, %c0_i32, %c0_i32_0 : i32, i32, i32
  }
  func.func @transform_17(%arg0: i32) -> (i32, i32, i32, i32) {
    %c0_i32 = arith.constant 0 : i32
    %c0_i32_0 = arith.constant 0 : i32
    %c0_i32_1 = arith.constant 0 : i32
    %c0_i32_2 = arith.constant 0 : i32
    return %arg0, %c0_i32, %c0_i32_0, %c0_i32_1 : i32, i32, i32, i32
  }
}

</mosaic_0001>

<llo_original>
// kernel: tpu_custom_call.1
$region0: #{tpu_custom_call.1}
  #allocation0 [shape = 'u32[]', space=smem, size = 0x4, offset = 0x4, fixed_abs, tag = 'smem constant byte address 0x4 - core index']
  #allocation1 [shape = 'u32[144,128]{1,0:T(1,128)}', space=vmem, size = 0x12000, scoped, tag = 'internal scratch']
  %s0 = inlined_call_operand.hbm [shape: f32[2,8,32], index: 0, kind: input, shape index: {}]
  %s1 = inlined_call_operand.hbm [shape: f32[2,8,8], index: 1, kind: input, shape index: {}]
  %s2 = inlined_call_operand.vmem [shape: f32[32,32], index: 2, kind: input, shape index: {}]
  %s3 = inlined_call_operand.vmem [shape: f32[1,32], index: 3, kind: input, shape index: {}]
  %s4 = inlined_call_operand.vmem [shape: f32[32,32], index: 4, kind: input, shape index: {}]
  %s5 = inlined_call_operand.vmem [shape: f32[1,32], index: 5, kind: input, shape index: {}]
  %s6 = inlined_call_operand.vmem [shape: f32[32,32], index: 6, kind: input, shape index: {}]
  %s7 = inlined_call_operand.vmem [shape: f32[1,32], index: 7, kind: input, shape index: {}]
  %s8 = inlined_call_operand.vmem [shape: f32[1,32], index: 8, kind: input, shape index: {}]
  %s9 = inlined_call_operand.vmem [shape: f32[1,32], index: 9, kind: input, shape index: {}]
  %s10 = inlined_call_operand.hbm [shape: f32[32,64], index: 10, kind: input, shape index: {}]
  %s11 = inlined_call_operand.vmem [shape: f32[1,64], index: 11, kind: input, shape index: {}]
  %s12 = inlined_call_operand.vmem [shape: f32[64,32], index: 12, kind: input, shape index: {}]
  %s13 = inlined_call_operand.vmem [shape: f32[1,32], index: 13, kind: input, shape index: {}]
  %s14 = inlined_call_operand.vmem [shape: f32[1,32], index: 14, kind: input, shape index: {}]
  %s15 = inlined_call_operand.vmem [shape: f32[1,32], index: 15, kind: input, shape index: {}]
  %s16 = inlined_call_operand.hbm [shape: f32[2,8,32], index: 16, kind: output, shape index: {0}]
  %s17 = inlined_call_operand.hbm [shape: f32[2,4,8,8], index: 17, kind: output, shape index: {1}]
  %18 = xla_tuple %s16, %s17
  %s19 = sld [smem:[#allocation0]]
  $region117: #{tpu_custom_call.1} parent=0
    _
  %s21 = ssub.s32 1, %s19
  %s22 = scalar_select 0, %s21, %s19
  $region1: #{tpu_custom_call.1} parent=0
    #allocation2 [shape = 'u8[8192]{0}', space=vmem, size = 0x2000, scoped, tag = 'input window, operand 0']
    #allocation3 [shape = 's32[2]{0}', space=sflag, size = 0x8, scoped, tag = 'scoped memory for tpu_custom_call.1']
    #allocation4 [shape = 's32[2]{0}', space=sflag, size = 0x8, scoped, tag = 'scoped memory for tpu_custom_call.1']
    #allocation5 [shape = 'u8[8192]{0}', space=vmem, size = 0x2000, scoped, tag = 'input window, operand 1']
    #allocation6 [shape = 's32[2]{0}', space=sflag, size = 0x8, scoped, tag = 'scoped memory for tpu_custom_call.1']
    #allocation7 [shape = 'u8[16384]{0}', space=vmem, size = 0x4000, scoped, tag = 'input window, operand 10, single buffered']
    #allocation8 [shape = 'u8[8192]{0}', space=vmem, size = 0x2000, scoped, tag = 'output window, operand 0']
    #allocation9 [shape = 'u8[32768]{0}', space=vmem, size = 0x8000, scoped, tag = 'output window, operand 1']
    #allocation10 [shape = 's32[2]{0}', space=sflag, size = 0x8, scoped, tag = 'scoped memory for tpu_custom_call.1']
    %23 = vsyncpa [#allocation3], 0
    %s24 = scalar_lea.sflag [#allocation3], 1
    %25 = vsyncpa %s24, 0
    %26 = vsyncpa [#allocation6], 0
    %s27 = scalar_lea.sflag [#allocation6], 1
    %28 = vsyncpa %s27, 0
    %29 = vsyncpa [#allocation4], 0
    %s30 = scalar_lea.sflag [#allocation4], 1
    %31 = vsyncpa %s30, 0
    %32 = vsyncpa [#allocation10], 0
    %s33 = scalar_lea.sflag [#allocation10], 1
    %34 = vsyncpa %s33, 0
    loop: start=0, step=1, limit=4
    $region2: #{tpu_custom_call.1} parent=1 // loop_pre_header
      _
    $region3: #{tpu_custom_call.1} parent=1 // loop_header
      %s36 = sphi 0, %s40
      %p37 = scmp.ge.s32.totalorder %s36, 4
      %s46 = sphi 0, %s48
      %s49 = sphi 0, %s46
      %s50 = sphi 0, %s49
      %s66 = sphi 0, %s50
      %s72 = sphi 0, %s74
      %s75 = sphi 0, %s72
      %s76 = sphi 0, %s75
      %s92 = sphi 0, %s76
      %s96 = sphi 0, %s96
      %s98 = sphi 0, %s96
      %s99 = sphi 0, %s98
      %s113 = sphi 0, %s99
      %s117 = sphi 0, %s117
      %s119 = sphi 0, %s117
      %s120 = sphi 0, %s119
      %s134 = sphi 0, %s120
      %s138 = sphi 0, %s138
      %s140 = sphi 0, %s138
      %s141 = sphi 0, %s140
      %s155 = sphi 0, %s141
      %s159 = sphi 0, %s159
      %s161 = sphi 0, %s159
      %s162 = sphi 0, %s161
      %s176 = sphi 0, %s162
      %s180 = sphi 0, %s180
      %s182 = sphi 0, %s180
      %s183 = sphi 0, %s182
      %s197 = sphi 0, %s183
      %s201 = sphi 0, %s201
      %s203 = sphi 0, %s201
      %s204 = sphi 0, %s203
      %s218 = sphi 0, %s204
      %s222 = sphi 0, %s222
      %s224 = sphi 0, %s222
      %s225 = sphi 0, %s224
      %s239 = sphi 0, %s225
      %s243 = sphi 0, %s243
      %s245 = sphi 0, %s243
      %s246 = sphi 0, %s245
      %s260 = sphi 0, %s246
      %s264 = sphi 0, %s264
      %s266 = sphi 0, %s264
      %s267 = sphi 0, %s266
      %s281 = sphi 0, %s267
      %s285 = sphi 0, %s285
      %s287 = sphi 0, %s285
      %s288 = sphi 0, %s287
      %s302 = sphi 0, %s288
      %s306 = sphi 0, %s306
      %s308 = sphi 0, %s306
      %s309 = sphi 0, %s308
      %s323 = sphi 0, %s309
      %s327 = sphi 0, %s327
      %s329 = sphi 0, %s327
      %s330 = sphi 0, %s329
      %s344 = sphi 0, %s330
      %s348 = sphi 0, %s348
      %s350 = sphi 0, %s348
      %s351 = sphi 0, %s350
      %s365 = sphi 0, %s351
      %s369 = sphi 0, %s369
      %s371 = sphi 0, %s369
      %s372 = sphi 0, %s371
      %s386 = sphi 0, %s372
      %s392 = sphi 0, %s394
      %s395 = sphi 0, %s392
      %s396 = sphi 0, %s395
      %s412 = sphi 0, %s396
      %s418 = sphi 0, %s420
      %s421 = sphi 0, %s418
      %s422 = sphi 0, %s421
      %s438 = sphi 0, %s422
    $region4: #{tpu_custom_call.1} parent=1 // loop_header_branch
      %39 = sbr.rel (%p37) target = $region8
    $region5: #{tpu_custom_call.1} parent=1 // loop_body
      %s41 = ssub.s32 %s36, 1
      %s42 = ssub.s32 %s36, 2
      %s43 = sadd.s32 %s36, 1
      %s44 = ssub.s32 %s36, %s43
      %p45 = scmp.eq.s32.totalorder %s44, 0
      %s47 = sadd.s32 %s46, 1
      %s48 = scalar_select %p45, %s46, %s47
      %p51 = pneg %p45
      %p52 = scmp.eq.s32.totalorder %s36, 1
      %p53 = por %p51, %p52
      %p54 = scmp.ne.s32.totalorder %s46, %s49
      %p55 = scmp.eq.s32.totalorder %s36, 0
      %p56 = por %p54, %p55
      %p57 = scmp.ne.s32.totalorder %s46, %s49
      %p58 = scmp.eq.s32.totalorder %s41, 1
      %p59 = por %p57, %p58
      %p60 = scmp.ne.s32.totalorder %s49, %s50
      %p61 = scmp.eq.s32.totalorder %s41, 0
      %p62 = por %p60, %p61
      %p63 = scmp.ne.s32.totalorder %s49, %s50
      %p64 = scmp.eq.s32.totalorder %s42, 1
      %p65 = por %p63, %p64
      %p67 = scmp.ne.s32.totalorder %s50, %s66
      %p68 = scmp.eq.s32.totalorder %s42, 0
      %p69 = por %p67, %p68
      %s70 = ssub.s32 %s36, %s43
      %p71 = scmp.eq.s32.totalorder %s70, 0
      %s73 = sadd.s32 %s72, 1
      %s74 = scalar_select %p71, %s72, %s73
      %p77 = pneg %p71
      %p78 = scmp.eq.s32.totalorder %s36, 1
      %p79 = por %p77, %p78
      %p80 = scmp.ne.s32.totalorder %s72, %s75
      %p81 = scmp.eq.s32.totalorder %s36, 0
      %p82 = por %p80, %p81
      %p83 = scmp.ne.s32.totalorder %s72, %s75
      %p84 = scmp.eq.s32.totalorder %s41, 1
      %p85 = por %p83, %p84
      %p86 = scmp.ne.s32.totalorder %s75, %s76
      %p87 = scmp.eq.s32.totalorder %s41, 0
      %p88 = por %p86, %p87
      %p89 = scmp.ne.s32.totalorder %s75, %s76
      %p90 = scmp.eq.s32.totalorder %s42, 1
      %p91 = por %p89, %p90
      %p93 = scmp.ne.s32.totalorder %s76, %s92
      %p94 = scmp.eq.s32.totalorder %s42, 0
      %p95 = por %p93, %p94
      %s97 = sadd.s32 %s96, 1
      %p100 = scmp.eq.s32.totalorder %s36, 1
      %p101 = scmp.ne.s32.totalorder %s96, %s98
      %p102 = scmp.eq.s32.totalorder %s36, 0
      %p103 = por %p101, %p102
      %p104 = scmp.ne.s32.totalorder %s96, %s98
      %p105 = scmp.eq.s32.totalorder %s41, 1
      %p106 = por %p104, %p105
      %p107 = scmp.ne.s32.totalorder %s98, %s99
      %p108 = scmp.eq.s32.totalorder %s41, 0
      %p109 = por %p107, %p108
      %p110 = scmp.ne.s32.totalorder %s98, %s99
      %p111 = scmp.eq.s32.totalorder %s42, 1
      %p112 = por %p110, %p111
      %p114 = scmp.ne.s32.totalorder %s99, %s113
      %p115 = scmp.eq.s32.totalorder %s42, 0
      %p116 = por %p114, %p115
      %s118 = sadd.s32 %s117, 1
      %p121 = scmp.eq.s32.totalorder %s36, 1
      %p122 = scmp.ne.s32.totalorder %s117, %s119
      %p123 = scmp.eq.s32.totalorder %s36, 0
      %p124 = por %p122, %p123
      %p125 = scmp.ne.s32.totalorder %s117, %s119
      %p126 = scmp.eq.s32.totalorder %s41, 1
      %p127 = por %p125, %p126
      %p128 = scmp.ne.s32.totalorder %s119, %s120
      %p129 = scmp.eq.s32.totalorder %s41, 0
      %p130 = por %p128, %p129
      %p131 = scmp.ne.s32.totalorder %s119, %s120
      %p132 = scmp.eq.s32.totalorder %s42, 1
      %p133 = por %p131, %p132
      %p135 = scmp.ne.s32.totalorder %s120, %s134
      %p136 = scmp.eq.s32.totalorder %s42, 0
      %p137 = por %p135, %p136
      %s139 = sadd.s32 %s138, 1
      %p142 = scmp.eq.s32.totalorder %s36, 1
      %p143 = scmp.ne.s32.totalorder %s138, %s140
      %p144 = scmp.eq.s32.totalorder %s36, 0
      %p145 = por %p143, %p144
      %p146 = scmp.ne.s32.totalorder %s138, %s140
      %p147 = scmp.eq.s32.totalorder %s41, 1
      %p148 = por %p146, %p147
      %p149 = scmp.ne.s32.totalorder %s140, %s141
      %p150 = scmp.eq.s32.totalorder %s41, 0
      %p151 = por %p149, %p150
      %p152 = scmp.ne.s32.totalorder %s140, %s141
      %p153 = scmp.eq.s32.totalorder %s42, 1
      %p154 = por %p152, %p153
      %p156 = scmp.ne.s32.totalorder %s141, %s155
      %p157 = scmp.eq.s32.totalorder %s42, 0
      %p158 = por %p156, %p157
      %s160 = sadd.s32 %s159, 1
      %p163 = scmp.eq.s32.totalorder %s36, 1
      %p164 = scmp.ne.s32.totalorder %s159, %s161
      %p165 = scmp.eq.s32.totalorder %s36, 0
      %p166 = por %p164, %p165
      %p167 = scmp.ne.s32.totalorder %s159, %s161
      %p168 = scmp.eq.s32.totalorder %s41, 1
      %p169 = por %p167, %p168
      %p170 = scmp.ne.s32.totalorder %s161, %s162
      %p171 = scmp.eq.s32.totalorder %s41, 0
      %p172 = por %p170, %p171
      %p173 = scmp.ne.s32.totalorder %s161, %s162
      %p174 = scmp.eq.s32.totalorder %s42, 1
      %p175 = por %p173, %p174
      %p177 = scmp.ne.s32.totalorder %s162, %s176
      %p178 = scmp.eq.s32.totalorder %s42, 0
      %p179 = por %p177, %p178
      %s181 = sadd.s32 %s180, 1
      %p184 = scmp.eq.s32.totalorder %s36, 1
      %p185 = scmp.ne.s32.totalorder %s180, %s182
      %p186 = scmp.eq.s32.totalorder %s36, 0
      %p187 = por %p185, %p186
      %p188 = scmp.ne.s32.totalorder %s180, %s182
      %p189 = scmp.eq.s32.totalorder %s41, 1
      %p190 = por %p188, %p189
      %p191 = scmp.ne.s32.totalorder %s182, %s183
      %p192 = scmp.eq.s32.totalorder %s41, 0
      %p193 = por %p191, %p192
      %p194 = scmp.ne.s32.totalorder %s182, %s183
      %p195 = scmp.eq.s32.totalorder %s42, 1
      %p196 = por %p194, %p195
      %p198 = scmp.ne.s32.totalorder %s183, %s197
      %p199 = scmp.eq.s32.totalorder %s42, 0
      %p200 = por %p198, %p199
      %s202 = sadd.s32 %s201, 1
      %p205 = scmp.eq.s32.totalorder %s36, 1
      %p206 = scmp.ne.s32.totalorder %s201, %s203
      %p207 = scmp.eq.s32.totalorder %s36, 0
      %p208 = por %p206, %p207
      %p209 = scmp.ne.s32.totalorder %s201, %s203
      %p210 = scmp.eq.s32.totalorder %s41, 1
      %p211 = por %p209, %p210
      %p212 = scmp.ne.s32.totalorder %s203, %s204
      %p213 = scmp.eq.s32.totalorder %s41, 0
      %p214 = por %p212, %p213
      %p215 = scmp.ne.s32.totalorder %s203, %s204
      %p216 = scmp.eq.s32.totalorder %s42, 1
      %p217 = por %p215, %p216
      %p219 = scmp.ne.s32.totalorder %s204, %s218
      %p220 = scmp.eq.s32.totalorder %s42, 0
      %p221 = por %p219, %p220
      %s223 = sadd.s32 %s222, 1
      %p226 = scmp.eq.s32.totalorder %s36, 1
      %p227 = scmp.ne.s32.totalorder %s222, %s224
      %p228 = scmp.eq.s32.totalorder %s36, 0
      %p229 = por %p227, %p228
      %p230 = scmp.ne.s32.totalorder %s222, %s224
      %p231 = scmp.eq.s32.totalorder %s41, 1
      %p232 = por %p230, %p231
      %p233 = scmp.ne.s32.totalorder %s224, %s225
      %p234 = scmp.eq.s32.totalorder %s41, 0
      %p235 = por %p233, %p234
      %p236 = scmp.ne.s32.totalorder %s224, %s225
      %p237 = scmp.eq.s32.totalorder %s42, 1
      %p238 = por %p236, %p237
      %p240 = scmp.ne.s32.totalorder %s225, %s239
      %p241 = scmp.eq.s32.totalorder %s42, 0
      %p242 = por %p240, %p241
      %s244 = sadd.s32 %s243, 1
      %p247 = scmp.eq.s32.totalorder %s36, 1
      %p248 = scmp.ne.s32.totalorder %s243, %s245
      %p249 = scmp.eq.s32.totalorder %s36, 0
      %p250 = por %p248, %p249
      %p251 = scmp.ne.s32.totalorder %s243, %s245
      %p252 = scmp.eq.s32.totalorder %s41, 1
      %p253 = por %p251, %p252
      %p254 = scmp.ne.s32.totalorder %s245, %s246
      %p255 = scmp.eq.s32.totalorder %s41, 0
      %p256 = por %p254, %p255
      %p257 = scmp.ne.s32.totalorder %s245, %s246
      %p258 = scmp.eq.s32.totalorder %s42, 1
      %p259 = por %p257, %p258
      %p261 = scmp.ne.s32.totalorder %s246, %s260
      %p262 = scmp.eq.s32.totalorder %s42, 0
      %p263 = por %p261, %p262
      %s265 = sadd.s32 %s264, 1
      %p268 = scmp.eq.s32.totalorder %s36, 1
      %p269 = scmp.ne.s32.totalorder %s264, %s266
      %p270 = scmp.eq.s32.totalorder %s36, 0
      %p271 = por %p269, %p270
      %p272 = scmp.ne.s32.totalorder %s264, %s266
      %p273 = scmp.eq.s32.totalorder %s41, 1
      %p274 = por %p272, %p273
      %p275 = scmp.ne.s32.totalorder %s266, %s267
      %p276 = scmp.eq.s32.totalorder %s41, 0
      %p277 = por %p275, %p276
      %p278 = scmp.ne.s32.totalorder %s266, %s267
      %p279 = scmp.eq.s32.totalorder %s42, 1
      %p280 = por %p278, %p279
      %p282 = scmp.ne.s32.totalorder %s267, %s281
      %p283 = scmp.eq.s32.totalorder %s42, 0
      %p284 = por %p282, %p283
      %s286 = sadd.s32 %s285, 1
      %p289 = scmp.eq.s32.totalorder %s36, 1
      %p290 = scmp.ne.s32.totalorder %s285, %s287
      %p291 = scmp.eq.s32.totalorder %s36, 0
      %p292 = por %p290, %p291
      %p293 = scmp.ne.s32.totalorder %s285, %s287
      %p294 = scmp.eq.s32.totalorder %s41, 1
      %p295 = por %p293, %p294
      %p296 = scmp.ne.s32.totalorder %s287, %s288
      %p297 = scmp.eq.s32.totalorder %s41, 0
      %p298 = por %p296, %p297
      %p299 = scmp.ne.s32.totalorder %s287, %s288
      %p300 = scmp.eq.s32.totalorder %s42, 1
      %p301 = por %p299, %p300
      %p303 = scmp.ne.s32.totalorder %s288, %s302
      %p304 = scmp.eq.s32.totalorder %s42, 0
      %p305 = por %p303, %p304
      %s307 = sadd.s32 %s306, 1
      %p310 = scmp.eq.s32.totalorder %s36, 1
      %p311 = scmp.ne.s32.totalorder %s306, %s308
      %p312 = scmp.eq.s32.totalorder %s36, 0
      %p313 = por %p311, %p312
      %p314 = scmp.ne.s32.totalorder %s306, %s308
      %p315 = scmp.eq.s32.totalorder %s41, 1
      %p316 = por %p314, %p315
      %p317 = scmp.ne.s32.totalorder %s308, %s309
      %p318 = scmp.eq.s32.totalorder %s41, 0
      %p319 = por %p317, %p318
      %p320 = scmp.ne.s32.totalorder %s308, %s309
      %p321 = scmp.eq.s32.totalorder %s42, 1
      %p322 = por %p320, %p321
      %p324 = scmp.ne.s32.totalorder %s309, %s323
      %p325 = scmp.eq.s32.totalorder %s42, 0
      %p326 = por %p324, %p325
      %s328 = sadd.s32 %s327, 1
      %p331 = scmp.eq.s32.totalorder %s36, 1
      %p332 = scmp.ne.s32.totalorder %s327, %s329
      %p333 = scmp.eq.s32.totalorder %s36, 0
      %p334 = por %p332, %p333
      %p335 = scmp.ne.s32.totalorder %s327, %s329
      %p336 = scmp.eq.s32.totalorder %s41, 1
      %p337 = por %p335, %p336
      %p338 = scmp.ne.s32.totalorder %s329, %s330
      %p339 = scmp.eq.s32.totalorder %s41, 0
      %p340 = por %p338, %p339
      %p341 = scmp.ne.s32.totalorder %s329, %s330
      %p342 = scmp.eq.s32.totalorder %s42, 1
      %p343 = por %p341, %p342
      %p345 = scmp.ne.s32.totalorder %s330, %s344
      %p346 = scmp.eq.s32.totalorder %s42, 0
      %p347 = por %p345, %p346
      %s349 = sadd.s32 %s348, 1
      %p352 = scmp.eq.s32.totalorder %s36, 1
      %p353 = scmp.ne.s32.totalorder %s348, %s350
      %p354 = scmp.eq.s32.totalorder %s36, 0
      %p355 = por %p353, %p354
      %p356 = scmp.ne.s32.totalorder %s348, %s350
      %p357 = scmp.eq.s32.totalorder %s41, 1
      %p358 = por %p356, %p357
      %p359 = scmp.ne.s32.totalorder %s350, %s351
      %p360 = scmp.eq.s32.totalorder %s41, 0
      %p361 = por %p359, %p360
      %p362 = scmp.ne.s32.totalorder %s350, %s351
      %p363 = scmp.eq.s32.totalorder %s42, 1
      %p364 = por %p362, %p363
      %p366 = scmp.ne.s32.totalorder %s351, %s365
      %p367 = scmp.eq.s32.totalorder %s42, 0
      %p368 = por %p366, %p367
      %s370 = sadd.s32 %s369, 1
      %p373 = scmp.eq.s32.totalorder %s36, 1
      %p374 = scmp.ne.s32.totalorder %s369, %s371
      %p375 = scmp.eq.s32.totalorder %s36, 0
      %p376 = por %p374, %p375
      %p377 = scmp.ne.s32.totalorder %s369, %s371
      %p378 = scmp.eq.s32.totalorder %s41, 1
      %p379 = por %p377, %p378
      %p380 = scmp.ne.s32.totalorder %s371, %s372
      %p381 = scmp.eq.s32.totalorder %s41, 0
      %p382 = por %p380, %p381
      %p383 = scmp.ne.s32.totalorder %s371, %s372
      %p384 = scmp.eq.s32.totalorder %s42, 1
      %p385 = por %p383, %p384
      %p387 = scmp.ne.s32.totalorder %s372, %s386
      %p388 = scmp.eq.s32.totalorder %s42, 0
      %p389 = por %p387, %p388
      %s390 = ssub.s32 %s36, %s43
      %p391 = scmp.eq.s32.totalorder %s390, 0
      %s393 = sadd.s32 %s392, 1
      %s394 = scalar_select %p391, %s392, %s393
      %p397 = pneg %p391
      %p398 = scmp.eq.s32.totalorder %s36, 1
      %p399 = por %p397, %p398
      %p400 = scmp.ne.s32.totalorder %s392, %s395
      %p401 = scmp.eq.s32.totalorder %s36, 0
      %p402 = por %p400, %p401
      %p403 = scmp.ne.s32.totalorder %s392, %s395
      %p404 = scmp.eq.s32.totalorder %s41, 1
      %p405 = por %p403, %p404
      %p406 = scmp.ne.s32.totalorder %s395, %s396
      %p407 = scmp.eq.s32.totalorder %s41, 0
      %p408 = por %p406, %p407
      %p409 = scmp.ne.s32.totalorder %s395, %s396
      %p410 = scmp.eq.s32.totalorder %s42, 1
      %p411 = por %p409, %p410
      %p413 = scmp.ne.s32.totalorder %s396, %s412
      %p414 = scmp.eq.s32.totalorder %s42, 0
      %p415 = por %p413, %p414
      %s416 = ssub.s32 %s36, %s43
      %p417 = scmp.eq.s32.totalorder %s416, 0
      %s419 = sadd.s32 %s418, 1
      %s420 = scalar_select %p417, %s418, %s419
      %p423 = pneg %p417
      %p424 = scmp.eq.s32.totalorder %s36, 1
      %p425 = por %p423, %p424
      %p426 = scmp.ne.s32.totalorder %s418, %s421
      %p427 = scmp.eq.s32.totalorder %s36, 0
      %p428 = por %p426, %p427
      %p429 = scmp.ne.s32.totalorder %s418, %s421
      %p430 = scmp.eq.s32.totalorder %s41, 1
      %p431 = por %p429, %p430
      %p432 = scmp.ne.s32.totalorder %s421, %s422
      %p433 = scmp.eq.s32.totalorder %s41, 0
      %p434 = por %p432, %p433
      %p435 = scmp.ne.s32.totalorder %s421, %s422
      %p436 = scmp.eq.s32.totalorder %s42, 1
      %p437 = por %p435, %p436
      %p439 = scmp.ne.s32.totalorder %s422, %s438
      %p440 = scmp.eq.s32.totalorder %s42, 0
      %p441 = por %p439, %p440
      %p442 = scmp.le.s32.totalorder 1, %s36
      %p443 = scmp.lt.s32.totalorder %s36, 3
      %p444 = pnand %p442, %p443
      %p445 = pneg %p444
      // Predicated region
      $region9: #{tpu_custom_call.1} parent=5 // pred_check
        _
      $region10: #{tpu_custom_call.1} parent=5 // pred_check_branch
        %447 = sbr.rel (%p444) target = $region12
      $region11: #{tpu_custom_call.1} parent=5 // pred_region
        %s448 = ssub.s32 %s36, 1
        // Predicated region
        $region13: #{tpu_custom_call.1} parent=11 // pred_check
          %p449 = pneg %p109
        $region14: #{tpu_custom_call.1} parent=11 // pred_check_branch
          %451 = sbr.rel (%p449) target = $region16
        $region15: #{tpu_custom_call.1} parent=11 // pred_region
          _
        $region16: #{tpu_custom_call.1} parent=11 // pred_fallthru
          _
        // Predicated region
        $region17: #{tpu_custom_call.1} parent=11 // pred_check
          %p452 = pneg %p130
        $region18: #{tpu_custom_call.1} parent=11 // pred_check_branch
          %454 = sbr.rel (%p452) target = $region20
        $region19: #{tpu_custom_call.1} parent=11 // pred_region
          _
        $region20: #{tpu_custom_call.1} parent=11 // pred_fallthru
          _
        // Predicated region
        $region21: #{tpu_custom_call.1} parent=11 // pred_check
          %p455 = pneg %p151
        $region22: #{tpu_custom_call.1} parent=11 // pred_check_branch
          %457 = sbr.rel (%p455) target = $region24
        $region23: #{tpu_custom_call.1} parent=11 // pred_region
          _
        $region24: #{tpu_custom_call.1} parent=11 // pred_fallthru
          _
        // Predicated region
        $region25: #{tpu_custom_call.1} parent=11 // pred_check
          %p458 = pneg %p172
        $region26: #{tpu_custom_call.1} parent=11 // pred_check_branch
          %460 = sbr.rel (%p458) target = $region28
        $region27: #{tpu_custom_call.1} parent=11 // pred_region
          _
        $region28: #{tpu_custom_call.1} parent=11 // pred_fallthru
          _
        // Predicated region
        $region29: #{tpu_custom_call.1} parent=11 // pred_check
          %p461 = pneg %p193
        $region30: #{tpu_custom_call.1} parent=11 // pred_check_branch
          %463 = sbr.rel (%p461) target = $region32
        $region31: #{tpu_custom_call.1} parent=11 // pred_region
          _
        $region32: #{tpu_custom_call.1} parent=11 // pred_fallthru
          _
        // Predicated region
        $region33: #{tpu_custom_call.1} parent=11 // pred_check
          %p464 = pneg %p214
        $region34: #{tpu_custom_call.1} parent=11 // pred_check_branch
          %466 = sbr.rel (%p464) target = $region36
        $region35: #{tpu_custom_call.1} parent=11 // pred_region
          _
        $region36: #{tpu_custom_call.1} parent=11 // pred_fallthru
          _
        // Predicated region
        $region37: #{tpu_custom_call.1} parent=11 // pred_check
          %p467 = pneg %p235
        $region38: #{tpu_custom_call.1} parent=11 // pred_check_branch
          %469 = sbr.rel (%p467) target = $region40
        $region39: #{tpu_custom_call.1} parent=11 // pred_region
          _
        $region40: #{tpu_custom_call.1} parent=11 // pred_fallthru
          _
        // Predicated region
        $region41: #{tpu_custom_call.1} parent=11 // pred_check
          %p470 = pneg %p256
        $region42: #{tpu_custom_call.1} parent=11 // pred_check_branch
          %472 = sbr.rel (%p470) target = $region44
        $region43: #{tpu_custom_call.1} parent=11 // pred_region
          _
        $region44: #{tpu_custom_call.1} parent=11 // pred_fallthru
          _
        // Predicated region
        $region45: #{tpu_custom_call.1} parent=11 // pred_check
          %p473 = pneg %p277
        $region46: #{tpu_custom_call.1} parent=11 // pred_check_branch
          %475 = sbr.rel (%p473) target = $region48
        $region47: #{tpu_custom_call.1} parent=11 // pred_region
          %s477 = ssub.s32 512, 512
          %478 = vsyncadd [#allocation6], %s477
          %s479 = sshll.u32 [#allocation7], 4
          %s480 = int_to_ptr.vmem [resolvable:$true] %s479
          %485 = dma.hbm_to_vmem [thread:$0]  %s10, 512, %s480, [#allocation6], 128, 128, 8
        $region48: #{tpu_custom_call.1} parent=11 // pred_fallthru
          _
        // Predicated region
        $region49: #{tpu_custom_call.1} parent=11 // pred_check
          %p486 = pneg %p298
        $region50: #{tpu_custom_call.1} parent=11 // pred_check_branch
          %488 = sbr.rel (%p486) target = $region52
        $region51: #{tpu_custom_call.1} parent=11 // pred_region
          _
        $region52: #{tpu_custom_call.1} parent=11 // pred_fallthru
          _
        // Predicated region
        $region53: #{tpu_custom_call.1} parent=11 // pred_check
          %p489 = pneg %p319
        $region54: #{tpu_custom_call.1} parent=11 // pred_check_branch
          %491 = sbr.rel (%p489) target = $region56
        $region55: #{tpu_custom_call.1} parent=11 // pred_region
          _
        $region56: #{tpu_custom_call.1} parent=11 // pred_fallthru
          _
        // Predicated region
        $region57: #{tpu_custom_call.1} parent=11 // pred_check
          %p492 = pneg %p340
        $region58: #{tpu_custom_call.1} parent=11 // pred_check_branch
          %494 = sbr.rel (%p492) target = $region60
        $region59: #{tpu_custom_call.1} parent=11 // pred_region
          _
        $region60: #{tpu_custom_call.1} parent=11 // pred_fallthru
          _
        // Predicated region
        $region61: #{tpu_custom_call.1} parent=11 // pred_check
          %p495 = pneg %p361
        $region62: #{tpu_custom_call.1} parent=11 // pred_check_branch
          %497 = sbr.rel (%p495) target = $region64
        $region63: #{tpu_custom_call.1} parent=11 // pred_region
          _
        $region64: #{tpu_custom_call.1} parent=11 // pred_fallthru
          _
        // Predicated region
        $region65: #{tpu_custom_call.1} parent=11 // pred_check
          %p498 = pneg %p382
        $region66: #{tpu_custom_call.1} parent=11 // pred_check_branch
          %500 = sbr.rel (%p498) target = $region68
        $region67: #{tpu_custom_call.1} parent=11 // pred_region
          _
        $region68: #{tpu_custom_call.1} parent=11 // pred_fallthru
          _
      $region12: #{tpu_custom_call.1} parent=5 // pred_fallthru
        _
      %p501 = scmp.lt.s32.totalorder %s36, 2
      // Predicated region
      $region69: #{tpu_custom_call.1} parent=5 // pred_check
        %p502 = pneg %p501
      $region70: #{tpu_custom_call.1} parent=5 // pred_check_branch
        %504 = sbr.rel (%p502) target = $region72
      $region71: #{tpu_custom_call.1} parent=5 // pred_region
        // Predicated region
        $region73: #{tpu_custom_call.1} parent=71 // pred_check
          %p505 = pneg %p56
        $region74: #{tpu_custom_call.1} parent=71 // pred_check_branch
          %507 = sbr.rel (%p505) target = $region76
        $region75: #{tpu_custom_call.1} parent=71 // pred_region
          %s508 = sand.u32 %s46, 1
          %s509 = scalar_lea.sflag [#allocation3], %s508
          %s510 = sand.u32 %s46, 1
          %s511 = smul.addr %s510, 8
          %s512 = scalar_lea.vmem [#allocation2], %s511
          %s514 = ssub.s32 128, 128
          %515 = vsyncadd %s509, %s514
          %s516 = smul.addr %s36, 128
          %s517 = scalar_lea.hbm %s0, %s516
          %s519 = sshll.u32 %s512, 4
          %s520 = int_to_ptr.vmem [resolvable:$true] %s519
          %522 = dma.hbm_to_vmem [thread:$0]  %s517, 128, %s520, %s509
        $region76: #{tpu_custom_call.1} parent=71 // pred_fallthru
          _
        // Predicated region
        $region77: #{tpu_custom_call.1} parent=71 // pred_check
          %p523 = pneg %p82
        $region78: #{tpu_custom_call.1} parent=71 // pred_check_branch
          %525 = sbr.rel (%p523) target = $region80
        $region79: #{tpu_custom_call.1} parent=71 // pred_region
          %s526 = sand.u32 %s36, 1
          %s527 = scalar_lea.sflag [#allocation6], %s526
          %s528 = sand.u32 %s72, 1
          %s529 = smul.addr %s528, 8
          %s530 = scalar_lea.vmem [#allocation5], %s529
          %s532 = ssub.s32 128, 128
          %533 = vsyncadd %s527, %s532
          %s534 = smul.addr %s36, 128
          %s535 = scalar_lea.hbm %s1, %s534
          %s537 = sshll.u32 %s530, 4
          %s538 = int_to_ptr.vmem [resolvable:$true] %s537
          %540 = dma.hbm_to_vmem [thread:$0]  %s535, 128, %s538, %s527
        $region80: #{tpu_custom_call.1} parent=71 // pred_fallthru
          _
      $region72: #{tpu_custom_call.1} parent=5 // pred_fallthru
        _
      %p541 = scmp.le.s32.totalorder 1, %s36
      %p542 = scmp.lt.s32.totalorder %s36, 3
      %p543 = pnand %p541, %p542
      %p544 = pneg %p543
      // Predicated region
      $region81: #{tpu_custom_call.1} parent=5 // pred_check
        _
      $region82: #{tpu_custom_call.1} parent=5 // pred_check_branch
        %546 = sbr.rel (%p543) target = $region84
      $region83: #{tpu_custom_call.1} parent=5 // pred_region
        %s547 = ssub.s32 %s36, 1
        %s548 = sand.u32 %s49, 1
        %s549 = scalar_lea.sflag [#allocation3], %s548
        %s550 = sand.u32 %s49, 1
        %s551 = smul.addr %s550, 8
        %s552 = scalar_lea.vmem [#allocation2], %s551
        // Predicated region
        $region85: #{tpu_custom_call.1} parent=83 // pred_check
          %p553 = pneg %p62
        $region86: #{tpu_custom_call.1} parent=83 // pred_check_branch
          %555 = sbr.rel (%p553) target = $region88
        $region87: #{tpu_custom_call.1} parent=83 // pred_region
          %556 = dma.done %s549, 128
        $region88: #{tpu_custom_call.1} parent=83 // pred_fallthru
          _
        %s557 = sand.u32 %s41, 1
        %s558 = scalar_lea.sflag [#allocation6], %s557
        %s559 = sand.u32 %s75, 1
        %s560 = smul.addr %s559, 8
        %s561 = scalar_lea.vmem [#allocation5], %s560
        // Predicated region
        $region89: #{tpu_custom_call.1} parent=83 // pred_check
          %p562 = pneg %p88
        $region90: #{tpu_custom_call.1} parent=83 // pred_check_branch
          %564 = sbr.rel (%p562) target = $region92
        $region91: #{tpu_custom_call.1} parent=83 // pred_region
          %565 = dma.done %s558, 128
        $region92: #{tpu_custom_call.1} parent=83 // pred_fallthru
          _
        // Predicated region
        $region93: #{tpu_custom_call.1} parent=83 // pred_check
          %p566 = pneg %p277
        $region94: #{tpu_custom_call.1} parent=83 // pred_check_branch
          %568 = sbr.rel (%p566) target = $region96
        $region95: #{tpu_custom_call.1} parent=83 // pred_region
          %569 = dma.done [#allocation6], 512
        $region96: #{tpu_custom_call.1} parent=83 // pred_fallthru
          _
        %s570 = sand.u32 %s49, 1
        %s571 = scalar_lea.sflag [#allocation3], %s570
        %s572 = sand.u32 %s49, 1
        %s573 = smul.addr %s572, 8
        %s574 = scalar_lea.vmem [#allocation2], %s573
        %p575 = pneg %p62
        %p576 = pneg %p59
        %s577 = sand.u32 %s41, 1
        %s578 = scalar_lea.sflag [#allocation6], %s577
        %s579 = sand.u32 %s75, 1
        %s580 = smul.addr %s579, 8
        %s581 = scalar_lea.vmem [#allocation5], %s580
        %p582 = pneg %p88
        %p583 = pneg %p85
        %p584 = pneg %p109
        %p585 = pneg %p106
        %p586 = pneg %p130
        %p587 = pneg %p127
        %p588 = pneg %p151
        %p589 = pneg %p148
        %p590 = pneg %p172
        %p591 = pneg %p169
        %p592 = pneg %p193
        %p593 = pneg %p190
        %p594 = pneg %p214
        %p595 = pneg %p211
        %p596 = pneg %p235
        %p597 = pneg %p232
        %p598 = pneg %p256
        %p599 = pneg %p253
        %p600 = pneg %p277
        %p601 = pneg %p274
        %p602 = pneg %p298
        %p603 = pneg %p295
        %p604 = pneg %p319
        %p605 = pneg %p316
        %p606 = pneg %p340
        %p607 = pneg %p337
        %p608 = pneg %p361
        %p609 = pneg %p358
        %p610 = pneg %p382
        %p611 = pneg %p379
        %p612 = pneg %p408
        %p613 = pneg %p405
        %s614 = sand.u32 %s395, 1
        %s615 = scalar_lea.sflag [#allocation4], %s614
        %s616 = sand.u32 %s395, 1
        %s617 = smul.addr %s616, 8
        %s618 = scalar_lea.vmem [#allocation8], %s617
        %p619 = pneg %p434
        %p620 = pneg %p431
        %s621 = sand.u32 %s421, 1
        %s622 = scalar_lea.sflag [#allocation10], %s621
        %s623 = sand.u32 %s421, 1
        %s624 = smul.addr %s623, 32
        %s625 = scalar_lea.vmem [#allocation9], %s624
        %v626 = vld [vmem:[%s552] sm:$0xff]
        %v627 = vld [vmem:[%s2] sm:$0xff]
        %v628 = vld [vmem:[%s2 + $0x8] sm:$0xff]
        %v629 = vld [vmem:[%s2 + $0x10] sm:$0xff]
        %v630 = vld [vmem:[%s2 + $0x18] sm:$0xff]
        %v631 = vld [vmem:[%s3] sm:$0x1]
        %v633 = vlaneseq
        %v634 = vshrl.u32 %v633, 7
        %v635 = vsub.s32 0, %v634
        %v636 = vrot.slane %v631, %v635
        %vm638 = vcmask 261120
        %v640 = vsel %vm638, %v626, 0
        %642 = vmatprep.subr.mxu0 0.0
        %643 = vmatpush1.msra.mxu0 0.0
        %644 = vmatprep.subr.mxu0 0.0
        %645 = vmatpush1.msra.mxu0 0.0
        %646 = vmatprep.subr.mxu0 0.0
        %647 = vmatpush1.msra.mxu0 0.0
        %648 = vmatprep.subr.mxu0 0.0
        %649 = vmatpush1.msra.mxu0 0.0
        %650 = vmatprep.subr.mxu0 0.0
        %651 = vmatpush1.msra.mxu0 0.0
        %652 = vmatprep.subr.mxu0 0.0
        %653 = vmatpush1.msra.mxu0 0.0
        %654 = vmatprep.subr.mxu0 0.0
        %655 = vmatpush1.msra.mxu0 0.0
        %656 = vmatprep.subr.mxu0 0.0
        %657 = vmatpush1.msra.mxu0 0.0
        %658 = vmatprep.subr.mxu0 0.0
        %659 = vmatpush1.msra.mxu0 0.0
        %660 = vmatprep.subr.mxu0 0.0
        %661 = vmatpush1.msra.mxu0 0.0
        %662 = vmatprep.subr.mxu0 0.0
        %663 = vmatpush1.msra.mxu0 0.0
        %664 = vmatprep.subr.mxu0 0.0
        %665 = vmatpush1.msra.mxu0 0.0
        %666 = vmatprep.subr.mxu0 0.0
        %667 = vmatpush1.msra.mxu0 %v630
        %668 = vmatprep.subr.mxu0 0.0
        %669 = vmatpush1.msra.mxu0 %v629
        %670 = vmatprep.subr.mxu0 0.0
        %671 = vmatpush1.msra.mxu0 %v628
        %672 = vmatprep.subr.mxu0 0.0
        %673 = vmatpush1.msra.mxu0 %v627
        %674 = vmatprep.subr.mxu0 0.0
        %675 = vmatpush2.msra.mxu0 0.0
        %676 = vmatprep.subr.mxu0 0.0
        %677 = vmatpush2.msra.mxu0 0.0
        %678 = vmatprep.subr.mxu0 0.0
        %679 = vmatpush2.msra.mxu0 0.0
        %680 = vmatprep.subr.mxu0 0.0
        %681 = vmatpush2.msra.mxu0 0.0
        %682 = vmatprep.subr.mxu0 0.0
        %683 = vmatpush2.msra.mxu0 0.0
        %684 = vmatprep.subr.mxu0 0.0
        %685 = vmatpush2.msra.mxu0 0.0
        %686 = vmatprep.subr.mxu0 0.0
        %687 = vmatpush2.msra.mxu0 0.0
        %688 = vmatprep.subr.mxu0 0.0
        %689 = vmatpush2.msra.mxu0 0.0
        %690 = vmatprep.subr.mxu0 0.0
        %691 = vmatpush2.msra.mxu0 0.0
        %692 = vmatprep.subr.mxu0 0.0
        %693 = vmatpush2.msra.mxu0 0.0
        %694 = vmatprep.subr.mxu0 0.0
        %695 = vmatpush2.msra.mxu0 0.0
        %696 = vmatprep.subr.mxu0 0.0
        %697 = vmatpush2.msra.mxu0 0.0
        %698 = vmatprep.subr.mxu0 0.0
        %699 = vmatpush2.msra.mxu0 0.0
        %700 = vmatprep.subr.mxu0 0.0
        %701 = vmatpush2.msra.mxu0 0.0
        %702 = vmatprep.subr.mxu0 0.0
        %703 = vmatpush2.msra.mxu0 0.0
        %704 = vmatprep.subr.mxu0 0.0
        %705 = vmatpush2.msra.mxu0 0.0
        %706 = vmatprep.mubr.f32.mxu0 0.0
        %707 = vmatmul.mubr.f32.gmra.mxu0 %v640
        %v708 = vpop.f32.mrf.mxu0
        %v709 = vadd.f32 %v636, %v708
        %v710 = vpop.f32.mrf.mxu0
        %711 = vdwg.mxu0
        %v712 = vld [vmem:[%s4] sm:$0xff]
        %v713 = vld [vmem:[%s4 + $0x8] sm:$0xff]
        %v714 = vld [vmem:[%s4 + $0x10] sm:$0xff]
        %v715 = vld [vmem:[%s4 + $0x18] sm:$0xff]
        %v716 = vld [vmem:[%s5] sm:$0x1]
        %v718 = vlaneseq
        %v719 = vshrl.u32 %v718, 7
        %v720 = vsub.s32 0, %v719
        %v721 = vrot.slane %v716, %v720
        %723 = vmatprep.subr.mxu0 0.0
        %724 = vmatpush1.msra.mxu0 0.0
        %725 = vmatprep.subr.mxu0 0.0
        %726 = vmatpush1.msra.mxu0 0.0
        %727 = vmatprep.subr.mxu0 0.0
        %728 = vmatpush1.msra.mxu0 0.0
        %729 = vmatprep.subr.mxu0 0.0
        %730 = vmatpush1.msra.mxu0 0.0
        %731 = vmatprep.subr.mxu0 0.0
        %732 = vmatpush1.msra.mxu0 0.0
        %733 = vmatprep.subr.mxu0 0.0
        %734 = vmatpush1.msra.mxu0 0.0
        %735 = vmatprep.subr.mxu0 0.0
        %736 = vmatpush1.msra.mxu0 0.0
        %737 = vmatprep.subr.mxu0 0.0
        %738 = vmatpush1.msra.mxu0 0.0
        %739 = vmatprep.subr.mxu0 0.0
        %740 = vmatpush1.msra.mxu0 0.0
        %741 = vmatprep.subr.mxu0 0.0
        %742 = vmatpush1.msra.mxu0 0.0
        %743 = vmatprep.subr.mxu0 0.0
        %744 = vmatpush1.msra.mxu0 0.0
        %745 = vmatprep.subr.mxu0 0.0
        %746 = vmatpush1.msra.mxu0 0.0
        %747 = vmatprep.subr.mxu0 0.0
        %748 = vmatpush1.msra.mxu0 %v715
        %749 = vmatprep.subr.mxu0 0.0
        %750 = vmatpush1.msra.mxu0 %v714
        %751 = vmatprep.subr.mxu0 0.0
        %752 = vmatpush1.msra.mxu0 %v713
        %753 = vmatprep.subr.mxu0 0.0
        %754 = vmatpush1.msra.mxu0 %v712
        %755 = vmatprep.subr.mxu0 0.0
        %756 = vmatpush2.msra.mxu0 0.0
        %757 = vmatprep.subr.mxu0 0.0
        %758 = vmatpush2.msra.mxu0 0.0
        %759 = vmatprep.subr.mxu0 0.0
        %760 = vmatpush2.msra.mxu0 0.0
        %761 = vmatprep.subr.mxu0 0.0
        %762 = vmatpush2.msra.mxu0 0.0
        %763 = vmatprep.subr.mxu0 0.0
        %764 = vmatpush2.msra.mxu0 0.0
        %765 = vmatprep.subr.mxu0 0.0
        %766 = vmatpush2.msra.mxu0 0.0
        %767 = vmatprep.subr.mxu0 0.0
        %768 = vmatpush2.msra.mxu0 0.0
        %769 = vmatprep.subr.mxu0 0.0
        %770 = vmatpush2.msra.mxu0 0.0
        %771 = vmatprep.subr.mxu0 0.0
        %772 = vmatpush2.msra.mxu0 0.0
        %773 = vmatprep.subr.mxu0 0.0
        %774 = vmatpush2.msra.mxu0 0.0
        %775 = vmatprep.subr.mxu0 0.0
        %776 = vmatpush2.msra.mxu0 0.0
        %777 = vmatprep.subr.mxu0 0.0
        %778 = vmatpush2.msra.mxu0 0.0
        %779 = vmatprep.subr.mxu0 0.0
        %780 = vmatpush2.msra.mxu0 0.0
        %781 = vmatprep.subr.mxu0 0.0
        %782 = vmatpush2.msra.mxu0 0.0
        %783 = vmatprep.subr.mxu0 0.0
        %784 = vmatpush2.msra.mxu0 0.0
        %785 = vmatprep.subr.mxu0 0.0
        %786 = vmatpush2.msra.mxu0 0.0
        %787 = vmatprep.mubr.f32.mxu0 0.0
        %788 = vmatmul.mubr.f32.gmra.mxu0 %v640
        %v789 = vpop.f32.mrf.mxu0
        %v790 = vadd.f32 %v721, %v789
        %v791 = vpop.f32.mrf.mxu0
        %792 = vdwg.mxu0
        %v793 = vld [vmem:[%s6] sm:$0xff]
        %v794 = vld [vmem:[%s6 + $0x8] sm:$0xff]
        %v795 = vld [vmem:[%s6 + $0x10] sm:$0xff]
        %v796 = vld [vmem:[%s6 + $0x18] sm:$0xff]
        %v797 = vld [vmem:[%s7] sm:$0x1]
        %v799 = vlaneseq
        %v800 = vshrl.u32 %v799, 7
        %v801 = vsub.s32 0, %v800
        %v802 = vrot.slane %v797, %v801
        %804 = vmatprep.subr.mxu0 0.0
        %805 = vmatpush1.msra.mxu0 0.0
        %806 = vmatprep.subr.mxu0 0.0
        %807 = vmatpush1.msra.mxu0 0.0
        %808 = vmatprep.subr.mxu0 0.0
        %809 = vmatpush1.msra.mxu0 0.0
        %810 = vmatprep.subr.mxu0 0.0
        %811 = vmatpush1.msra.mxu0 0.0
        %812 = vmatprep.subr.mxu0 0.0
        %813 = vmatpush1.msra.mxu0 0.0
        %814 = vmatprep.subr.mxu0 0.0
        %815 = vmatpush1.msra.mxu0 0.0
        %816 = vmatprep.subr.mxu0 0.0
        %817 = vmatpush1.msra.mxu0 0.0
        %818 = vmatprep.subr.mxu0 0.0
        %819 = vmatpush1.msra.mxu0 0.0
        %820 = vmatprep.subr.mxu0 0.0
        %821 = vmatpush1.msra.mxu0 0.0
        %822 = vmatprep.subr.mxu0 0.0
        %823 = vmatpush1.msra.mxu0 0.0
        %824 = vmatprep.subr.mxu0 0.0
        %825 = vmatpush1.msra.mxu0 0.0
        %826 = vmatprep.subr.mxu0 0.0
        %827 = vmatpush1.msra.mxu0 0.0
        %828 = vmatprep.subr.mxu0 0.0
        %829 = vmatpush1.msra.mxu0 %v796
        %830 = vmatprep.subr.mxu0 0.0
        %831 = vmatpush1.msra.mxu0 %v795
        %832 = vmatprep.subr.mxu0 0.0
        %833 = vmatpush1.msra.mxu0 %v794
        %834 = vmatprep.subr.mxu0 0.0
        %835 = vmatpush1.msra.mxu0 %v793
        %836 = vmatprep.subr.mxu0 0.0
        %837 = vmatpush2.msra.mxu0 0.0
        %838 = vmatprep.subr.mxu0 0.0
        %839 = vmatpush2.msra.mxu0 0.0
        %840 = vmatprep.subr.mxu0 0.0
        %841 = vmatpush2.msra.mxu0 0.0
        %842 = vmatprep.subr.mxu0 0.0
        %843 = vmatpush2.msra.mxu0 0.0
        %844 = vmatprep.subr.mxu0 0.0
        %845 = vmatpush2.msra.mxu0 0.0
        %846 = vmatprep.subr.mxu0 0.0
        %847 = vmatpush2.msra.mxu0 0.0
        %848 = vmatprep.subr.mxu0 0.0
        %849 = vmatpush2.msra.mxu0 0.0
        %850 = vmatprep.subr.mxu0 0.0
        %851 = vmatpush2.msra.mxu0 0.0
        %852 = vmatprep.subr.mxu0 0.0
        %853 = vmatpush2.msra.mxu0 0.0
        %854 = vmatprep.subr.mxu0 0.0
        %855 = vmatpush2.msra.mxu0 0.0
        %856 = vmatprep.subr.mxu0 0.0
        %857 = vmatpush2.msra.mxu0 0.0
        %858 = vmatprep.subr.mxu0 0.0
        %859 = vmatpush2.msra.mxu0 0.0
        %860 = vmatprep.subr.mxu0 0.0
        %861 = vmatpush2.msra.mxu0 0.0
        %862 = vmatprep.subr.mxu0 0.0
        %863 = vmatpush2.msra.mxu0 0.0
        %864 = vmatprep.subr.mxu0 0.0
        %865 = vmatpush2.msra.mxu0 0.0
        %866 = vmatprep.subr.mxu0 0.0
        %867 = vmatpush2.msra.mxu0 0.0
        %868 = vmatprep.mubr.f32.mxu0 0.0
        %869 = vmatmul.mubr.f32.gmra.mxu0 %v640
        %v870 = vpop.f32.mrf.mxu0
        %v871 = vadd.f32 %v802, %v870
        %v872 = vpop.f32.mrf.mxu0
        %873 = vdwg.mxu0
        %v874 = vmul.f32 %v709, 0.35355338
        %876 = vrot.lane.b32.xlu0 %v874, 120
        %v877 = vpop.permute.xlu0 %876
        %878 = vrot.lane.b32.xlu0 %v874, 112
        %v879 = vpop.permute.xlu0 %878
        %880 = vrot.lane.b32.xlu0 %v874, 104
        %v881 = vpop.permute.xlu0 %880
        %883 = vrot.lane.b32.xlu0 %v790, 120
        %v884 = vpop.permute.xlu0 %883
        %885 = vrot.lane.b32.xlu0 %v790, 112
        %v886 = vpop.permute.xlu0 %885
        %887 = vrot.lane.b32.xlu0 %v790, 104
        %v888 = vpop.permute.xlu0 %887
        %890 = vrot.lane.b32.xlu0 %v871, 120
        %v891 = vpop.permute.xlu0 %890
        %893 = vrot.lane.b32.xlu0 %v871, 112
        %v894 = vpop.permute.xlu0 %893
        %896 = vrot.lane.b32.xlu0 %v871, 104
        %v897 = vpop.permute.xlu0 %896
        %v899 = vld [vmem:[%s561] sm:$0xff]
        %vm900 = vcmask 64512
        %v901 = vsel %vm900, %v874, 0
        %v903 = vsel %vm900, %v790, 0
        %905 = vmatprep.subr.mxu0 0.0
        %906 = vmatpush1.xpose.msra.mxu0 0.0
        %907 = vmatprep.subr.mxu0 0.0
        %908 = vmatpush1.xpose.msra.mxu0 0.0
        %909 = vmatprep.subr.mxu0 0.0
        %910 = vmatpush1.xpose.msra.mxu0 0.0
        %911 = vmatprep.subr.mxu0 0.0
        %912 = vmatpush1.xpose.msra.mxu0 0.0
        %913 = vmatprep.subr.mxu0 0.0
        %914 = vmatpush1.xpose.msra.mxu0 0.0
        %915 = vmatprep.subr.mxu0 0.0
        %916 = vmatpush1.xpose.msra.mxu0 0.0
        %917 = vmatprep.subr.mxu0 0.0
        %918 = vmatpush1.xpose.msra.mxu0 0.0
        %919 = vmatprep.subr.mxu0 0.0
        %920 = vmatpush1.xpose.msra.mxu0 0.0
        %921 = vmatprep.subr.mxu0 0.0
        %922 = vmatpush1.xpose.msra.mxu0 0.0
        %923 = vmatprep.subr.mxu0 0.0
        %924 = vmatpush1.xpose.msra.mxu0 0.0
        %925 = vmatprep.subr.mxu0 0.0
        %926 = vmatpush1.xpose.msra.mxu0 0.0
        %927 = vmatprep.subr.mxu0 0.0
        %928 = vmatpush1.xpose.msra.mxu0 0.0
        %929 = vmatprep.subr.mxu0 0.0
        %930 = vmatpush1.xpose.msra.mxu0 0.0
        %931 = vmatprep.subr.mxu0 0.0
        %932 = vmatpush1.xpose.msra.mxu0 0.0
        %933 = vmatprep.subr.mxu0 0.0
        %934 = vmatpush1.xpose.msra.mxu0 0.0
        %935 = vmatprep.subr.mxu0 0.0
        %936 = vmatpush1.xpose.msra.mxu0 %v903
        %937 = vmatprep.subr.mxu0 0.0
        %938 = vmatpush2.xpose.msra.mxu0 0.0
        %939 = vmatprep.subr.mxu0 0.0
        %940 = vmatpush2.xpose.msra.mxu0 0.0
        %941 = vmatprep.subr.mxu0 0.0
        %942 = vmatpush2.xpose.msra.mxu0 0.0
        %943 = vmatprep.subr.mxu0 0.0
        %944 = vmatpush2.xpose.msra.mxu0 0.0
        %945 = vmatprep.subr.mxu0 0.0
        %946 = vmatpush2.xpose.msra.mxu0 0.0
        %947 = vmatprep.subr.mxu0 0.0
        %948 = vmatpush2.xpose.msra.mxu0 0.0
        %949 = vmatprep.subr.mxu0 0.0
        %950 = vmatpush2.xpose.msra.mxu0 0.0
        %951 = vmatprep.subr.mxu0 0.0
        %952 = vmatpush2.xpose.msra.mxu0 0.0
        %953 = vmatprep.subr.mxu0 0.0
        %954 = vmatpush2.xpose.msra.mxu0 0.0
        %955 = vmatprep.subr.mxu0 0.0
        %956 = vmatpush2.xpose.msra.mxu0 0.0
        %957 = vmatprep.subr.mxu0 0.0
        %958 = vmatpush2.xpose.msra.mxu0 0.0
        %959 = vmatprep.subr.mxu0 0.0
        %960 = vmatpush2.xpose.msra.mxu0 0.0
        %961 = vmatprep.subr.mxu0 0.0
        %962 = vmatpush2.xpose.msra.mxu0 0.0
        %963 = vmatprep.subr.mxu0 0.0
        %964 = vmatpush2.xpose.msra.mxu0 0.0
        %965 = vmatprep.subr.mxu0 0.0
        %966 = vmatpush2.xpose.msra.mxu0 0.0
        %967 = vmatprep.subr.mxu0 0.0
        %968 = vmatpush2.xpose.msra.mxu0 0.0
        %969 = vmatprep.mubr.f32.mxu0 0.0
        %970 = vmatmul.mubr.f32.gmra.mxu0 %v901
        %v971 = vpop.f32.mrf.mxu0
        %v972 = vadd.f32 %v899, %v971
        %v973 = vpop.f32.mrf.mxu0
        %974 = vdwg.mxu0
        %v975 = vsel %vm900, %v877, 0
        %v977 = vsel %vm900, %v884, 0
        %979 = vmatprep.subr.mxu0 0.0
        %980 = vmatpush1.xpose.msra.mxu0 0.0
        %981 = vmatprep.subr.mxu0 0.0
        %982 = vmatpush1.xpose.msra.mxu0 0.0
        %983 = vmatprep.subr.mxu0 0.0
        %984 = vmatpush1.xpose.msra.mxu0 0.0
        %985 = vmatprep.subr.mxu0 0.0
        %986 = vmatpush1.xpose.msra.mxu0 0.0
        %987 = vmatprep.subr.mxu0 0.0
        %988 = vmatpush1.xpose.msra.mxu0 0.0
        %989 = vmatprep.subr.mxu0 0.0
        %990 = vmatpush1.xpose.msra.mxu0 0.0
        %991 = vmatprep.subr.mxu0 0.0
        %992 = vmatpush1.xpose.msra.mxu0 0.0
        %993 = vmatprep.subr.mxu0 0.0
        %994 = vmatpush1.xpose.msra.mxu0 0.0
        %995 = vmatprep.subr.mxu0 0.0
        %996 = vmatpush1.xpose.msra.mxu0 0.0
        %997 = vmatprep.subr.mxu0 0.0
        %998 = vmatpush1.xpose.msra.mxu0 0.0
        %999 = vmatprep.subr.mxu0 0.0
        %1000 = vmatpush1.xpose.msra.mxu0 0.0
        %1001 = vmatprep.subr.mxu0 0.0
        %1002 = vmatpush1.xpose.msra.mxu0 0.0
        %1003 = vmatprep.subr.mxu0 0.0
        %1004 = vmatpush1.xpose.msra.mxu0 0.0
        %1005 = vmatprep.subr.mxu0 0.0
        %1006 = vmatpush1.xpose.msra.mxu0 0.0
        %1007 = vmatprep.subr.mxu0 0.0
        %1008 = vmatpush1.xpose.msra.mxu0 0.0
        %1009 = vmatprep.subr.mxu0 0.0
        %1010 = vmatpush1.xpose.msra.mxu0 %v977
        %1011 = vmatprep.subr.mxu0 0.0
        %1012 = vmatpush2.xpose.msra.mxu0 0.0
        %1013 = vmatprep.subr.mxu0 0.0
        %1014 = vmatpush2.xpose.msra.mxu0 0.0
        %1015 = vmatprep.subr.mxu0 0.0
        %1016 = vmatpush2.xpose.msra.mxu0 0.0
        %1017 = vmatprep.subr.mxu0 0.0
        %1018 = vmatpush2.xpose.msra.mxu0 0.0
        %1019 = vmatprep.subr.mxu0 0.0
        %1020 = vmatpush2.xpose.msra.mxu0 0.0
        %1021 = vmatprep.subr.mxu0 0.0
        %1022 = vmatpush2.xpose.msra.mxu0 0.0
        %1023 = vmatprep.subr.mxu0 0.0
        %1024 = vmatpush2.xpose.msra.mxu0 0.0
        %1025 = vmatprep.subr.mxu0 0.0
        %1026 = vmatpush2.xpose.msra.mxu0 0.0
        %1027 = vmatprep.subr.mxu0 0.0
        %1028 = vmatpush2.xpose.msra.mxu0 0.0
        %1029 = vmatprep.subr.mxu0 0.0
        %1030 = vmatpush2.xpose.msra.mxu0 0.0
        %1031 = vmatprep.subr.mxu0 0.0
        %1032 = vmatpush2.xpose.msra.mxu0 0.0
        %1033 = vmatprep.subr.mxu0 0.0
        %1034 = vmatpush2.xpose.msra.mxu0 0.0
        %1035 = vmatprep.subr.mxu0 0.0
        %1036 = vmatpush2.xpose.msra.mxu0 0.0
        %1037 = vmatprep.subr.mxu0 0.0
        %1038 = vmatpush2.xpose.msra.mxu0 0.0
        %1039 = vmatprep.subr.mxu0 0.0
        %1040 = vmatpush2.xpose.msra.mxu0 0.0
        %1041 = vmatprep.subr.mxu0 0.0
        %1042 = vmatpush2.xpose.msra.mxu0 0.0
        %1043 = vmatprep.mubr.f32.mxu0 0.0
        %1044 = vmatmul.mubr.f32.gmra.mxu0 %v975
        %v1045 = vpop.f32.mrf.mxu0
        %v1046 = vadd.f32 %v899, %v1045
        %v1047 = vpop.f32.mrf.mxu0
        %1048 = vdwg.mxu0
        %v1049 = vsel %vm900, %v879, 0
        %v1051 = vsel %vm900, %v886, 0
        %1053 = vmatprep.subr.mxu0 0.0
        %1054 = vmatpush1.xpose.msra.mxu0 0.0
        %1055 = vmatprep.subr.mxu0 0.0
        %1056 = vmatpush1.xpose.msra.mxu0 0.0
        %1057 = vmatprep.subr.mxu0 0.0
        %1058 = vmatpush1.xpose.msra.mxu0 0.0
        %1059 = vmatprep.subr.mxu0 0.0
        %1060 = vmatpush1.xpose.msra.mxu0 0.0
        %1061 = vmatprep.subr.mxu0 0.0
        %1062 = vmatpush1.xpose.msra.mxu0 0.0
        %1063 = vmatprep.subr.mxu0 0.0
        %1064 = vmatpush1.xpose.msra.mxu0 0.0
        %1065 = vmatprep.subr.mxu0 0.0
        %1066 = vmatpush1.xpose.msra.mxu0 0.0
        %1067 = vmatprep.subr.mxu0 0.0
        %1068 = vmatpush1.xpose.msra.mxu0 0.0
        %1069 = vmatprep.subr.mxu0 0.0
        %1070 = vmatpush1.xpose.msra.mxu0 0.0
        %1071 = vmatprep.subr.mxu0 0.0
        %1072 = vmatpush1.xpose.msra.mxu0 0.0
        %1073 = vmatprep.subr.mxu0 0.0
        %1074 = vmatpush1.xpose.msra.mxu0 0.0
        %1075 = vmatprep.subr.mxu0 0.0
        %1076 = vmatpush1.xpose.msra.mxu0 0.0
        %1077 = vmatprep.subr.mxu0 0.0
        %1078 = vmatpush1.xpose.msra.mxu0 0.0
        %1079 = vmatprep.subr.mxu0 0.0
        %1080 = vmatpush1.xpose.msra.mxu0 0.0
        %1081 = vmatprep.subr.mxu0 0.0
        %1082 = vmatpush1.xpose.msra.mxu0 0.0
        %1083 = vmatprep.subr.mxu0 0.0
        %1084 = vmatpush1.xpose.msra.mxu0 %v1051
        %1085 = vmatprep.subr.mxu0 0.0
        %1086 = vmatpush2.xpose.msra.mxu0 0.0
        %1087 = vmatprep.subr.mxu0 0.0
        %1088 = vmatpush2.xpose.msra.mxu0 0.0
        %1089 = vmatprep.subr.mxu0 0.0
        %1090 = vmatpush2.xpose.msra.mxu0 0.0
        %1091 = vmatprep.subr.mxu0 0.0
        %1092 = vmatpush2.xpose.msra.mxu0 0.0
        %1093 = vmatprep.subr.mxu0 0.0
        %1094 = vmatpush2.xpose.msra.mxu0 0.0
        %1095 = vmatprep.subr.mxu0 0.0
        %1096 = vmatpush2.xpose.msra.mxu0 0.0
        %1097 = vmatprep.subr.mxu0 0.0
        %1098 = vmatpush2.xpose.msra.mxu0 0.0
        %1099 = vmatprep.subr.mxu0 0.0
        %1100 = vmatpush2.xpose.msra.mxu0 0.0
        %1101 = vmatprep.subr.mxu0 0.0
        %1102 = vmatpush2.xpose.msra.mxu0 0.0
        %1103 = vmatprep.subr.mxu0 0.0
        %1104 = vmatpush2.xpose.msra.mxu0 0.0
        %1105 = vmatprep.subr.mxu0 0.0
        %1106 = vmatpush2.xpose.msra.mxu0 0.0
        %1107 = vmatprep.subr.mxu0 0.0
        %1108 = vmatpush2.xpose.msra.mxu0 0.0
        %1109 = vmatprep.subr.mxu0 0.0
        %1110 = vmatpush2.xpose.msra.mxu0 0.0
        %1111 = vmatprep.subr.mxu0 0.0
        %1112 = vmatpush2.xpose.msra.mxu0 0.0
        %1113 = vmatprep.subr.mxu0 0.0
        %1114 = vmatpush2.xpose.msra.mxu0 0.0
        %1115 = vmatprep.subr.mxu0 0.0
        %1116 = vmatpush2.xpose.msra.mxu0 0.0
        %1117 = vmatprep.mubr.f32.mxu0 0.0
        %1118 = vmatmul.mubr.f32.gmra.mxu0 %v1049
        %v1119 = vpop.f32.mrf.mxu0
        %v1120 = vadd.f32 %v899, %v1119
        %v1121 = vpop.f32.mrf.mxu0
        %1122 = vdwg.mxu0
        %v1123 = vsel %vm900, %v881, 0
        %v1125 = vsel %vm900, %v888, 0
        %1127 = vmatprep.subr.mxu0 0.0
        %1128 = vmatpush1.xpose.msra.mxu0 0.0
        %1129 = vmatprep.subr.mxu0 0.0
        %1130 = vmatpush1.xpose.msra.mxu0 0.0
        %1131 = vmatprep.subr.mxu0 0.0
        %1132 = vmatpush1.xpose.msra.mxu0 0.0
        %1133 = vmatprep.subr.mxu0 0.0
        %1134 = vmatpush1.xpose.msra.mxu0 0.0
        %1135 = vmatprep.subr.mxu0 0.0
        %1136 = vmatpush1.xpose.msra.mxu0 0.0
        %1137 = vmatprep.subr.mxu0 0.0
        %1138 = vmatpush1.xpose.msra.mxu0 0.0
        %1139 = vmatprep.subr.mxu0 0.0
        %1140 = vmatpush1.xpose.msra.mxu0 0.0
        %1141 = vmatprep.subr.mxu0 0.0
        %1142 = vmatpush1.xpose.msra.mxu0 0.0
        %1143 = vmatprep.subr.mxu0 0.0
        %1144 = vmatpush1.xpose.msra.mxu0 0.0
        %1145 = vmatprep.subr.mxu0 0.0
        %1146 = vmatpush1.xpose.msra.mxu0 0.0
        %1147 = vmatprep.subr.mxu0 0.0
        %1148 = vmatpush1.xpose.msra.mxu0 0.0
        %1149 = vmatprep.subr.mxu0 0.0
        %1150 = vmatpush1.xpose.msra.mxu0 0.0
        %1151 = vmatprep.subr.mxu0 0.0
        %1152 = vmatpush1.xpose.msra.mxu0 0.0
        %1153 = vmatprep.subr.mxu0 0.0
        %1154 = vmatpush1.xpose.msra.mxu0 0.0
        %1155 = vmatprep.subr.mxu0 0.0
        %1156 = vmatpush1.xpose.msra.mxu0 0.0
        %1157 = vmatprep.subr.mxu0 0.0
        %1158 = vmatpush1.xpose.msra.mxu0 %v1125
        %1159 = vmatprep.subr.mxu0 0.0
        %1160 = vmatpush2.xpose.msra.mxu0 0.0
        %1161 = vmatprep.subr.mxu0 0.0
        %1162 = vmatpush2.xpose.msra.mxu0 0.0
        %1163 = vmatprep.subr.mxu0 0.0
        %1164 = vmatpush2.xpose.msra.mxu0 0.0
        %1165 = vmatprep.subr.mxu0 0.0
        %1166 = vmatpush2.xpose.msra.mxu0 0.0
        %1167 = vmatprep.subr.mxu0 0.0
        %1168 = vmatpush2.xpose.msra.mxu0 0.0
        %1169 = vmatprep.subr.mxu0 0.0
        %1170 = vmatpush2.xpose.msra.mxu0 0.0
        %1171 = vmatprep.subr.mxu0 0.0
        %1172 = vmatpush2.xpose.msra.mxu0 0.0
        %1173 = vmatprep.subr.mxu0 0.0
        %1174 = vmatpush2.xpose.msra.mxu0 0.0
        %1175 = vmatprep.subr.mxu0 0.0
        %1176 = vmatpush2.xpose.msra.mxu0 0.0
        %1177 = vmatprep.subr.mxu0 0.0
        %1178 = vmatpush2.xpose.msra.mxu0 0.0
        %1179 = vmatprep.subr.mxu0 0.0
        %1180 = vmatpush2.xpose.msra.mxu0 0.0
        %1181 = vmatprep.subr.mxu0 0.0
        %1182 = vmatpush2.xpose.msra.mxu0 0.0
        %1183 = vmatprep.subr.mxu0 0.0
        %1184 = vmatpush2.xpose.msra.mxu0 0.0
        %1185 = vmatprep.subr.mxu0 0.0
        %1186 = vmatpush2.xpose.msra.mxu0 0.0
        %1187 = vmatprep.subr.mxu0 0.0
        %1188 = vmatpush2.xpose.msra.mxu0 0.0
        %1189 = vmatprep.subr.mxu0 0.0
        %1190 = vmatpush2.xpose.msra.mxu0 0.0
        %1191 = vmatprep.mubr.f32.mxu0 0.0
        %1192 = vmatmul.mubr.f32.gmra.mxu0 %v1123
        %v1193 = vpop.f32.mrf.mxu0
        %v1194 = vadd.f32 %v899, %v1193
        %v1195 = vpop.f32.mrf.mxu0
        %1196 = vdwg.mxu0
        %v1197 = vsel %vm900, %v972, -inf
        %1198 = vmax.xlane.f32.xlu0 %v1197
        %v1199 = vpop.xlane.xlu0 %1198
        %v1200 = vsel %vm900, %v1046, -inf
        %1201 = vmax.xlane.f32.xlu0 %v1200
        %v1202 = vpop.xlane.xlu0 %1201
        %v1203 = vsel %vm900, %v1120, -inf
        %1204 = vmax.xlane.f32.xlu0 %v1203
        %v1205 = vpop.xlane.xlu0 %1204
        %v1206 = vsel %vm900, %v1194, -inf
        %1207 = vmax.xlane.f32.xlu0 %v1206
        %v1208 = vpop.xlane.xlu0 %1207
        %v1209 = vsub.f32 %v972, %v1199
        %v1210 = vsub.f32 %v1046, %v1202
        %v1211 = vsub.f32 %v1120, %v1205
        %v1212 = vsub.f32 %v1194, %v1208
        %v1213 = vmul.f32 %v1209, 1.442695
        %v1214 = vpow.pop %v1213
        %v1215 = vmul.f32 %v1210, 1.442695
        %v1216 = vpow.pop %v1215
        %v1217 = vmul.f32 %v1211, 1.442695
        %v1218 = vpow.pop %v1217
        %v1219 = vmul.f32 %v1212, 1.442695
        %v1220 = vpow.pop %v1219
        %v1221 = vsel %vm900, %v1214, 0.0
        %1222 = vadd.xlane.f32.xlu0 %v1221
        %v1223 = vpop.xlane.xlu0 %1222
        %v1224 = vsel %vm900, %v1216, 0.0
        %1225 = vadd.xlane.f32.xlu0 %v1224
        %v1226 = vpop.xlane.xlu0 %1225
        %v1227 = vsel %vm900, %v1218, 0.0
        %1228 = vadd.xlane.f32.xlu0 %v1227
        %v1229 = vpop.xlane.xlu0 %1228
        %v1230 = vsel %vm900, %v1220, 0.0
        %1231 = vadd.xlane.f32.xlu0 %v1230
        %v1232 = vpop.xlane.xlu0 %1231
        %v1233 = vrcp.pop %v1223
        %v1234 = vrcp.pop %v1226
        %v1235 = vrcp.pop %v1229
        %v1236 = vrcp.pop %v1232
        %v1237 = vmul.f32 %v1214, %v1233
        %v1238 = vmul.f32 %v1216, %v1234
        %v1239 = vmul.f32 %v1218, %v1235
        %v1240 = vmul.f32 %v1220, %v1236
        %1241 = vst.msk [vmem:[%s625] sm:$0xff] %vm900, %v1237
        %1242 = vst.msk [vmem:[%s625 + $0x8] sm:$0xff] %vm900, %v1238
        %1243 = vst.msk [vmem:[%s625 + $0x10] sm:$0xff] %vm900, %v1239
        %1244 = vst.msk [vmem:[%s625 + $0x18] sm:$0xff] %vm900, %v1240
        %v1246 = vsel %vm900, %v1237, 0
        %1248 = vmatprep.subr.mxu0 0.0
        %1249 = vmatpush1.msra.mxu0 0.0
        %1250 = vmatprep.subr.mxu0 0.0
        %1251 = vmatpush1.msra.mxu0 0.0
        %1252 = vmatprep.subr.mxu0 0.0
        %1253 = vmatpush1.msra.mxu0 0.0
        %1254 = vmatprep.subr.mxu0 0.0
        %1255 = vmatpush1.msra.mxu0 0.0
        %1256 = vmatprep.subr.mxu0 0.0
        %1257 = vmatpush1.msra.mxu0 0.0
        %1258 = vmatprep.subr.mxu0 0.0
        %1259 = vmatpush1.msra.mxu0 0.0
        %1260 = vmatprep.subr.mxu0 0.0
        %1261 = vmatpush1.msra.mxu0 0.0
        %1262 = vmatprep.subr.mxu0 0.0
        %1263 = vmatpush1.msra.mxu0 0.0
        %1264 = vmatprep.subr.mxu0 0.0
        %1265 = vmatpush1.msra.mxu0 0.0
        %1266 = vmatprep.subr.mxu0 0.0
        %1267 = vmatpush1.msra.mxu0 0.0
        %1268 = vmatprep.subr.mxu0 0.0
        %1269 = vmatpush1.msra.mxu0 0.0
        %1270 = vmatprep.subr.mxu0 0.0
        %1271 = vmatpush1.msra.mxu0 0.0
        %1272 = vmatprep.subr.mxu0 0.0
        %1273 = vmatpush1.msra.mxu0 0.0
        %1274 = vmatprep.subr.mxu0 0.0
        %1275 = vmatpush1.msra.mxu0 0.0
        %1276 = vmatprep.subr.mxu0 0.0
        %1277 = vmatpush1.msra.mxu0 0.0
        %1278 = vmatprep.subr.mxu0 0.0
        %1279 = vmatpush1.msra.mxu0 %v871
        %1280 = vmatprep.subr.mxu0 0.0
        %1281 = vmatpush2.msra.mxu0 0.0
        %1282 = vmatprep.subr.mxu0 0.0
        %1283 = vmatpush2.msra.mxu0 0.0
        %1284 = vmatprep.subr.mxu0 0.0
        %1285 = vmatpush2.msra.mxu0 0.0
        %1286 = vmatprep.subr.mxu0 0.0
        %1287 = vmatpush2.msra.mxu0 0.0
        %1288 = vmatprep.subr.mxu0 0.0
        %1289 = vmatpush2.msra.mxu0 0.0
        %1290 = vmatprep.subr.mxu0 0.0
        %1291 = vmatpush2.msra.mxu0 0.0
        %1292 = vmatprep.subr.mxu0 0.0
        %1293 = vmatpush2.msra.mxu0 0.0
        %1294 = vmatprep.subr.mxu0 0.0
        %1295 = vmatpush2.msra.mxu0 0.0
        %1296 = vmatprep.subr.mxu0 0.0
        %1297 = vmatpush2.msra.mxu0 0.0
        %1298 = vmatprep.subr.mxu0 0.0
        %1299 = vmatpush2.msra.mxu0 0.0
        %1300 = vmatprep.subr.mxu0 0.0
        %1301 = vmatpush2.msra.mxu0 0.0
        %1302 = vmatprep.subr.mxu0 0.0
        %1303 = vmatpush2.msra.mxu0 0.0
        %1304 = vmatprep.subr.mxu0 0.0
        %1305 = vmatpush2.msra.mxu0 0.0
        %1306 = vmatprep.subr.mxu0 0.0
        %1307 = vmatpush2.msra.mxu0 0.0
        %1308 = vmatprep.subr.mxu0 0.0
        %1309 = vmatpush2.msra.mxu0 0.0
        %1310 = vmatprep.subr.mxu0 0.0
        %1311 = vmatpush2.msra.mxu0 0.0
        %1312 = vmatprep.mubr.f32.mxu0 0.0
        %1313 = vmatmul.mubr.f32.gmra.mxu0 %v1246
        %v1314 = vpop.f32.mrf.mxu0
        %v1315 = vadd.f32 0.0, %v1314
        %v1316 = vpop.f32.mrf.mxu0
        %1317 = vdwg.mxu0
        %v1319 = vsel %vm900, %v1238, 0
        %1321 = vmatprep.subr.mxu0 0.0
        %1322 = vmatpush1.msra.mxu0 0.0
        %1323 = vmatprep.subr.mxu0 0.0
        %1324 = vmatpush1.msra.mxu0 0.0
        %1325 = vmatprep.subr.mxu0 0.0
        %1326 = vmatpush1.msra.mxu0 0.0
        %1327 = vmatprep.subr.mxu0 0.0
        %1328 = vmatpush1.msra.mxu0 0.0
        %1329 = vmatprep.subr.mxu0 0.0
        %1330 = vmatpush1.msra.mxu0 0.0
        %1331 = vmatprep.subr.mxu0 0.0
        %1332 = vmatpush1.msra.mxu0 0.0
        %1333 = vmatprep.subr.mxu0 0.0
        %1334 = vmatpush1.msra.mxu0 0.0
        %1335 = vmatprep.subr.mxu0 0.0
        %1336 = vmatpush1.msra.mxu0 0.0
        %1337 = vmatprep.subr.mxu0 0.0
        %1338 = vmatpush1.msra.mxu0 0.0
        %1339 = vmatprep.subr.mxu0 0.0
        %1340 = vmatpush1.msra.mxu0 0.0
        %1341 = vmatprep.subr.mxu0 0.0
        %1342 = vmatpush1.msra.mxu0 0.0
        %1343 = vmatprep.subr.mxu0 0.0
        %1344 = vmatpush1.msra.mxu0 0.0
        %1345 = vmatprep.subr.mxu0 0.0
        %1346 = vmatpush1.msra.mxu0 0.0
        %1347 = vmatprep.subr.mxu0 0.0
        %1348 = vmatpush1.msra.mxu0 0.0
        %1349 = vmatprep.subr.mxu0 0.0
        %1350 = vmatpush1.msra.mxu0 0.0
        %1351 = vmatprep.subr.mxu0 0.0
        %1352 = vmatpush1.msra.mxu0 %v891
        %1353 = vmatprep.subr.mxu0 0.0
        %1354 = vmatpush2.msra.mxu0 0.0
        %1355 = vmatprep.subr.mxu0 0.0
        %1356 = vmatpush2.msra.mxu0 0.0
        %1357 = vmatprep.subr.mxu0 0.0
        %1358 = vmatpush2.msra.mxu0 0.0
        %1359 = vmatprep.subr.mxu0 0.0
        %1360 = vmatpush2.msra.mxu0 0.0
        %1361 = vmatprep.subr.mxu0 0.0
        %1362 = vmatpush2.msra.mxu0 0.0
        %1363 = vmatprep.subr.mxu0 0.0
        %1364 = vmatpush2.msra.mxu0 0.0
        %1365 = vmatprep.subr.mxu0 0.0
        %1366 = vmatpush2.msra.mxu0 0.0
        %1367 = vmatprep.subr.mxu0 0.0
        %1368 = vmatpush2.msra.mxu0 0.0
        %1369 = vmatprep.subr.mxu0 0.0
        %1370 = vmatpush2.msra.mxu0 0.0
        %1371 = vmatprep.subr.mxu0 0.0
        %1372 = vmatpush2.msra.mxu0 0.0
        %1373 = vmatprep.subr.mxu0 0.0
        %1374 = vmatpush2.msra.mxu0 0.0
        %1375 = vmatprep.subr.mxu0 0.0
        %1376 = vmatpush2.msra.mxu0 0.0
        %1377 = vmatprep.subr.mxu0 0.0
        %1378 = vmatpush2.msra.mxu0 0.0
        %1379 = vmatprep.subr.mxu0 0.0
        %1380 = vmatpush2.msra.mxu0 0.0
        %1381 = vmatprep.subr.mxu0 0.0
        %1382 = vmatpush2.msra.mxu0 0.0
        %1383 = vmatprep.subr.mxu0 0.0
        %1384 = vmatpush2.msra.mxu0 0.0
        %1385 = vmatprep.mubr.f32.mxu0 0.0
        %1386 = vmatmul.mubr.f32.gmra.mxu0 %v1319
        %v1387 = vpop.f32.mrf.mxu0
        %v1388 = vadd.f32 0.0, %v1387
        %v1389 = vpop.f32.mrf.mxu0
        %1390 = vdwg.mxu0
        %v1392 = vsel %vm900, %v1239, 0
        %1394 = vmatprep.subr.mxu0 0.0
        %1395 = vmatpush1.msra.mxu0 0.0
        %1396 = vmatprep.subr.mxu0 0.0
        %1397 = vmatpush1.msra.mxu0 0.0
        %1398 = vmatprep.subr.mxu0 0.0
        %1399 = vmatpush1.msra.mxu0 0.0
        %1400 = vmatprep.subr.mxu0 0.0
        %1401 = vmatpush1.msra.mxu0 0.0
        %1402 = vmatprep.subr.mxu0 0.0
        %1403 = vmatpush1.msra.mxu0 0.0
        %1404 = vmatprep.subr.mxu0 0.0
        %1405 = vmatpush1.msra.mxu0 0.0
        %1406 = vmatprep.subr.mxu0 0.0
        %1407 = vmatpush1.msra.mxu0 0.0
        %1408 = vmatprep.subr.mxu0 0.0
        %1409 = vmatpush1.msra.mxu0 0.0
        %1410 = vmatprep.subr.mxu0 0.0
        %1411 = vmatpush1.msra.mxu0 0.0
        %1412 = vmatprep.subr.mxu0 0.0
        %1413 = vmatpush1.msra.mxu0 0.0
        %1414 = vmatprep.subr.mxu0 0.0
        %1415 = vmatpush1.msra.mxu0 0.0
        %1416 = vmatprep.subr.mxu0 0.0
        %1417 = vmatpush1.msra.mxu0 0.0
        %1418 = vmatprep.subr.mxu0 0.0
        %1419 = vmatpush1.msra.mxu0 0.0
        %1420 = vmatprep.subr.mxu0 0.0
        %1421 = vmatpush1.msra.mxu0 0.0
        %1422 = vmatprep.subr.mxu0 0.0
        %1423 = vmatpush1.msra.mxu0 0.0
        %1424 = vmatprep.subr.mxu0 0.0
        %1425 = vmatpush1.msra.mxu0 %v894
        %1426 = vmatprep.subr.mxu0 0.0
        %1427 = vmatpush2.msra.mxu0 0.0
        %1428 = vmatprep.subr.mxu0 0.0
        %1429 = vmatpush2.msra.mxu0 0.0
        %1430 = vmatprep.subr.mxu0 0.0
        %1431 = vmatpush2.msra.mxu0 0.0
        %1432 = vmatprep.subr.mxu0 0.0
        %1433 = vmatpush2.msra.mxu0 0.0
        %1434 = vmatprep.subr.mxu0 0.0
        %1435 = vmatpush2.msra.mxu0 0.0
        %1436 = vmatprep.subr.mxu0 0.0
        %1437 = vmatpush2.msra.mxu0 0.0
        %1438 = vmatprep.subr.mxu0 0.0
        %1439 = vmatpush2.msra.mxu0 0.0
        %1440 = vmatprep.subr.mxu0 0.0
        %1441 = vmatpush2.msra.mxu0 0.0
        %1442 = vmatprep.subr.mxu0 0.0
        %1443 = vmatpush2.msra.mxu0 0.0
        %1444 = vmatprep.subr.mxu0 0.0
        %1445 = vmatpush2.msra.mxu0 0.0
        %1446 = vmatprep.subr.mxu0 0.0
        %1447 = vmatpush2.msra.mxu0 0.0
        %1448 = vmatprep.subr.mxu0 0.0
        %1449 = vmatpush2.msra.mxu0 0.0
        %1450 = vmatprep.subr.mxu0 0.0
        %1451 = vmatpush2.msra.mxu0 0.0
        %1452 = vmatprep.subr.mxu0 0.0
        %1453 = vmatpush2.msra.mxu0 0.0
        %1454 = vmatprep.subr.mxu0 0.0
        %1455 = vmatpush2.msra.mxu0 0.0
        %1456 = vmatprep.subr.mxu0 0.0
        %1457 = vmatpush2.msra.mxu0 0.0
        %1458 = vmatprep.mubr.f32.mxu0 0.0
        %1459 = vmatmul.mubr.f32.gmra.mxu0 %v1392
        %v1460 = vpop.f32.mrf.mxu0
        %v1461 = vadd.f32 0.0, %v1460
        %v1462 = vpop.f32.mrf.mxu0
        %1463 = vdwg.mxu0
        %v1465 = vsel %vm900, %v1240, 0
        %1467 = vmatprep.subr.mxu0 0.0
        %1468 = vmatpush1.msra.mxu0 0.0
        %1469 = vmatprep.subr.mxu0 0.0
        %1470 = vmatpush1.msra.mxu0 0.0
        %1471 = vmatprep.subr.mxu0 0.0
        %1472 = vmatpush1.msra.mxu0 0.0
        %1473 = vmatprep.subr.mxu0 0.0
        %1474 = vmatpush1.msra.mxu0 0.0
        %1475 = vmatprep.subr.mxu0 0.0
        %1476 = vmatpush1.msra.mxu0 0.0
        %1477 = vmatprep.subr.mxu0 0.0
        %1478 = vmatpush1.msra.mxu0 0.0
        %1479 = vmatprep.subr.mxu0 0.0
        %1480 = vmatpush1.msra.mxu0 0.0
        %1481 = vmatprep.subr.mxu0 0.0
        %1482 = vmatpush1.msra.mxu0 0.0
        %1483 = vmatprep.subr.mxu0 0.0
        %1484 = vmatpush1.msra.mxu0 0.0
        %1485 = vmatprep.subr.mxu0 0.0
        %1486 = vmatpush1.msra.mxu0 0.0
        %1487 = vmatprep.subr.mxu0 0.0
        %1488 = vmatpush1.msra.mxu0 0.0
        %1489 = vmatprep.subr.mxu0 0.0
        %1490 = vmatpush1.msra.mxu0 0.0
        %1491 = vmatprep.subr.mxu0 0.0
        %1492 = vmatpush1.msra.mxu0 0.0
        %1493 = vmatprep.subr.mxu0 0.0
        %1494 = vmatpush1.msra.mxu0 0.0
        %1495 = vmatprep.subr.mxu0 0.0
        %1496 = vmatpush1.msra.mxu0 0.0
        %1497 = vmatprep.subr.mxu0 0.0
        %1498 = vmatpush1.msra.mxu0 %v897
        %1499 = vmatprep.subr.mxu0 0.0
        %1500 = vmatpush2.msra.mxu0 0.0
        %1501 = vmatprep.subr.mxu0 0.0
        %1502 = vmatpush2.msra.mxu0 0.0
        %1503 = vmatprep.subr.mxu0 0.0
        %1504 = vmatpush2.msra.mxu0 0.0
        %1505 = vmatprep.subr.mxu0 0.0
        %1506 = vmatpush2.msra.mxu0 0.0
        %1507 = vmatprep.subr.mxu0 0.0
        %1508 = vmatpush2.msra.mxu0 0.0
        %1509 = vmatprep.subr.mxu0 0.0
        %1510 = vmatpush2.msra.mxu0 0.0
        %1511 = vmatprep.subr.mxu0 0.0
        %1512 = vmatpush2.msra.mxu0 0.0
        %1513 = vmatprep.subr.mxu0 0.0
        %1514 = vmatpush2.msra.mxu0 0.0
        %1515 = vmatprep.subr.mxu0 0.0
        %1516 = vmatpush2.msra.mxu0 0.0
        %1517 = vmatprep.subr.mxu0 0.0
        %1518 = vmatpush2.msra.mxu0 0.0
        %1519 = vmatprep.subr.mxu0 0.0
        %1520 = vmatpush2.msra.mxu0 0.0
        %1521 = vmatprep.subr.mxu0 0.0
        %1522 = vmatpush2.msra.mxu0 0.0
        %1523 = vmatprep.subr.mxu0 0.0
        %1524 = vmatpush2.msra.mxu0 0.0
        %1525 = vmatprep.subr.mxu0 0.0
        %1526 = vmatpush2.msra.mxu0 0.0
        %1527 = vmatprep.subr.mxu0 0.0
        %1528 = vmatpush2.msra.mxu0 0.0
        %1529 = vmatprep.subr.mxu0 0.0
        %1530 = vmatpush2.msra.mxu0 0.0
        %1531 = vmatprep.mubr.f32.mxu0 0.0
        %1532 = vmatmul.mubr.f32.gmra.mxu0 %v1465
        %v1533 = vpop.f32.mrf.mxu0
        %v1534 = vadd.f32 0.0, %v1533
        %v1535 = vpop.f32.mrf.mxu0
        %1536 = vdwg.mxu0
        %1538 = vrot.lane.b32.xlu0 %v1388, 8
        %v1539 = vpop.permute.xlu0 %1538
        %1542 = vrot.lane.b32.xlu0 %v1461, 16
        %v1543 = vpop.permute.xlu0 %1542
        %1546 = vrot.lane.b32.xlu0 %v1534, 24
        %v1547 = vpop.permute.xlu0 %1546
        %v1549 = vsel %vm900, %v1315, %v1539
        %vm1550 = vcmask 130048
        %v1551 = vsel %vm1550, %v1549, %v1543
        %vm1552 = vcmask 195584
        %v1553 = vsel %vm1552, %v1551, %v1547
        %v1554 = vadd.f32 %v1553, %v626
        %v1555 = vsel %vm638, %v1554, 0.0
        %1556 = vadd.xlane.f32.xlu0 %v1555
        %v1557 = vpop.xlane.xlu0 %1556
        %v1558 = vrcp.pop 32.0
        %v1559 = vmul.f32 %v1557, %v1558
        %v1560 = vsub.f32 %v1554, %v1559
        %v1561 = vmul.f32 %v1560, %v1560
        %v1562 = vsel %vm638, %v1561, 0.0
        %1563 = vadd.xlane.f32.xlu0 %v1562
        %v1564 = vpop.xlane.xlu0 %1563
        %v1565 = vmul.f32 %v1564, %v1558
        %v1566 = vadd.f32 %v1565, 1e-05
        %v1567 = vrsqrt.pop %v1566
        %v1568 = vmul.f32 %v1560, %v1567
        %v1569 = vld [vmem:[%s8] sm:$0x1]
        %v1571 = vlaneseq
        %v1572 = vshrl.u32 %v1571, 7
        %v1573 = vsub.s32 0, %v1572
        %v1574 = vrot.slane %v1569, %v1573
        %v1576 = vmul.f32 %v1568, %v1574
        %v1577 = vld [vmem:[%s9] sm:$0x1]
        %v1579 = vlaneseq
        %v1580 = vshrl.u32 %v1579, 7
        %v1581 = vsub.s32 0, %v1580
        %v1582 = vrot.slane %v1577, %v1581
        %v1584 = vadd.f32 %v1576, %v1582
        %v1585 = vld [vmem:[#allocation7] sm:$0xff]
        %v1586 = vld [vmem:[#allocation7 + $0x8] sm:$0xff]
        %v1587 = vld [vmem:[#allocation7 + $0x10] sm:$0xff]
        %v1588 = vld [vmem:[#allocation7 + $0x18] sm:$0xff]
        %v1589 = vld [vmem:[%s11] sm:$0x1]
        %v1591 = vlaneseq
        %v1592 = vshrl.u32 %v1591, 7
        %v1593 = vsub.s32 0, %v1592
        %v1594 = vrot.slane %v1589, %v1593
        %v1597 = vsel %vm638, %v1584, 0
        %1599 = vmatprep.subr.mxu0 0.0
        %1600 = vmatpush1.msra.mxu0 0.0
        %1601 = vmatprep.subr.mxu0 0.0
        %1602 = vmatpush1.msra.mxu0 0.0
        %1603 = vmatprep.subr.mxu0 0.0
        %1604 = vmatpush1.msra.mxu0 0.0
        %1605 = vmatprep.subr.mxu0 0.0
        %1606 = vmatpush1.msra.mxu0 0.0
        %1607 = vmatprep.subr.mxu0 0.0
        %1608 = vmatpush1.msra.mxu0 0.0
        %1609 = vmatprep.subr.mxu0 0.0
        %1610 = vmatpush1.msra.mxu0 0.0
        %1611 = vmatprep.subr.mxu0 0.0
        %1612 = vmatpush1.msra.mxu0 0.0
        %1613 = vmatprep.subr.mxu0 0.0
        %1614 = vmatpush1.msra.mxu0 0.0
        %1615 = vmatprep.subr.mxu0 0.0
        %1616 = vmatpush1.msra.mxu0 0.0
        %1617 = vmatprep.subr.mxu0 0.0
        %1618 = vmatpush1.msra.mxu0 0.0
        %1619 = vmatprep.subr.mxu0 0.0
        %1620 = vmatpush1.msra.mxu0 0.0
        %1621 = vmatprep.subr.mxu0 0.0
        %1622 = vmatpush1.msra.mxu0 0.0
        %1623 = vmatprep.subr.mxu0 0.0
        %1624 = vmatpush1.msra.mxu0 %v1588
        %1625 = vmatprep.subr.mxu0 0.0
        %1626 = vmatpush1.msra.mxu0 %v1587
        %1627 = vmatprep.subr.mxu0 0.0
        %1628 = vmatpush1.msra.mxu0 %v1586
        %1629 = vmatprep.subr.mxu0 0.0
        %1630 = vmatpush1.msra.mxu0 %v1585
        %1631 = vmatprep.subr.mxu0 0.0
        %1632 = vmatpush2.msra.mxu0 0.0
        %1633 = vmatprep.subr.mxu0 0.0
        %1634 = vmatpush2.msra.mxu0 0.0
        %1635 = vmatprep.subr.mxu0 0.0
        %1636 = vmatpush2.msra.mxu0 0.0
        %1637 = vmatprep.subr.mxu0 0.0
        %1638 = vmatpush2.msra.mxu0 0.0
        %1639 = vmatprep.subr.mxu0 0.0
        %1640 = vmatpush2.msra.mxu0 0.0
        %1641 = vmatprep.subr.mxu0 0.0
        %1642 = vmatpush2.msra.mxu0 0.0
        %1643 = vmatprep.subr.mxu0 0.0
        %1644 = vmatpush2.msra.mxu0 0.0
        %1645 = vmatprep.subr.mxu0 0.0
        %1646 = vmatpush2.msra.mxu0 0.0
        %1647 = vmatprep.subr.mxu0 0.0
        %1648 = vmatpush2.msra.mxu0 0.0
        %1649 = vmatprep.subr.mxu0 0.0
        %1650 = vmatpush2.msra.mxu0 0.0
        %1651 = vmatprep.subr.mxu0 0.0
        %1652 = vmatpush2.msra.mxu0 0.0
        %1653 = vmatprep.subr.mxu0 0.0
        %1654 = vmatpush2.msra.mxu0 0.0
        %1655 = vmatprep.subr.mxu0 0.0
        %1656 = vmatpush2.msra.mxu0 0.0
        %1657 = vmatprep.subr.mxu0 0.0
        %1658 = vmatpush2.msra.mxu0 0.0
        %1659 = vmatprep.subr.mxu0 0.0
        %1660 = vmatpush2.msra.mxu0 0.0
        %1661 = vmatprep.subr.mxu0 0.0
        %1662 = vmatpush2.msra.mxu0 0.0
        %1663 = vmatprep.mubr.f32.mxu0 0.0
        %1664 = vmatmul.mubr.f32.gmra.mxu0 %v1597
        %v1665 = vpop.f32.mrf.mxu0
        %v1666 = vadd.f32 %v1594, %v1665
        %v1667 = vpop.f32.mrf.mxu0
        %1668 = vdwg.mxu0
        %v1669 = vmax.f32 %v1666, 0.0
        %v1670 = vld [vmem:[%s12] sm:$0xff]
        %v1671 = vld [vmem:[%s12 + $0x8] sm:$0xff]
        %v1672 = vld [vmem:[%s12 + $0x10] sm:$0xff]
        %v1673 = vld [vmem:[%s12 + $0x18] sm:$0xff]
        %v1674 = vld [vmem:[%s12 + $0x20] sm:$0xff]
        %v1675 = vld [vmem:[%s12 + $0x28] sm:$0xff]
        %v1676 = vld [vmem:[%s12 + $0x30] sm:$0xff]
        %v1677 = vld [vmem:[%s12 + $0x38] sm:$0xff]
        %v1678 = vld [vmem:[%s13] sm:$0x1]
        %v1680 = vlaneseq
        %v1681 = vshrl.u32 %v1680, 7
        %v1682 = vsub.s32 0, %v1681
        %v1683 = vrot.slane %v1678, %v1682
        %vm1685 = vcmask 523264
        %v1687 = vsel %vm1685, %v1669, 0
        %1689 = vmatprep.subr.mxu0 0.0
        %1690 = vmatpush1.msra.mxu0 0.0
        %1691 = vmatprep.subr.mxu0 0.0
        %1692 = vmatpush1.msra.mxu0 0.0
        %1693 = vmatprep.subr.mxu0 0.0
        %1694 = vmatpush1.msra.mxu0 0.0
        %1695 = vmatprep.subr.mxu0 0.0
        %1696 = vmatpush1.msra.mxu0 0.0
        %1697 = vmatprep.subr.mxu0 0.0
        %1698 = vmatpush1.msra.mxu0 0.0
        %1699 = vmatprep.subr.mxu0 0.0
        %1700 = vmatpush1.msra.mxu0 0.0
        %1701 = vmatprep.subr.mxu0 0.0
        %1702 = vmatpush1.msra.mxu0 0.0
        %1703 = vmatprep.subr.mxu0 0.0
        %1704 = vmatpush1.msra.mxu0 0.0
        %1705 = vmatprep.subr.mxu0 0.0
        %1706 = vmatpush1.msra.mxu0 %v1677
        %1707 = vmatprep.subr.mxu0 0.0
        %1708 = vmatpush1.msra.mxu0 %v1676
        %1709 = vmatprep.subr.mxu0 0.0
        %1710 = vmatpush1.msra.mxu0 %v1675
        %1711 = vmatprep.subr.mxu0 0.0
        %1712 = vmatpush1.msra.mxu0 %v1674
        %1713 = vmatprep.subr.mxu0 0.0
        %1714 = vmatpush1.msra.mxu0 %v1673
        %1715 = vmatprep.subr.mxu0 0.0
        %1716 = vmatpush1.msra.mxu0 %v1672
        %1717 = vmatprep.subr.mxu0 0.0
        %1718 = vmatpush1.msra.mxu0 %v1671
        %1719 = vmatprep.subr.mxu0 0.0
        %1720 = vmatpush1.msra.mxu0 %v1670
        %1721 = vmatprep.subr.mxu0 0.0
        %1722 = vmatpush2.msra.mxu0 0.0
        %1723 = vmatprep.subr.mxu0 0.0
        %1724 = vmatpush2.msra.mxu0 0.0
        %1725 = vmatprep.subr.mxu0 0.0
        %1726 = vmatpush2.msra.mxu0 0.0
        %1727 = vmatprep.subr.mxu0 0.0
        %1728 = vmatpush2.msra.mxu0 0.0
        %1729 = vmatprep.subr.mxu0 0.0
        %1730 = vmatpush2.msra.mxu0 0.0
        %1731 = vmatprep.subr.mxu0 0.0
        %1732 = vmatpush2.msra.mxu0 0.0
        %1733 = vmatprep.subr.mxu0 0.0
        %1734 = vmatpush2.msra.mxu0 0.0
        %1735 = vmatprep.subr.mxu0 0.0
        %1736 = vmatpush2.msra.mxu0 0.0
        %1737 = vmatprep.subr.mxu0 0.0
        %1738 = vmatpush2.msra.mxu0 0.0
        %1739 = vmatprep.subr.mxu0 0.0
        %1740 = vmatpush2.msra.mxu0 0.0
        %1741 = vmatprep.subr.mxu0 0.0
        %1742 = vmatpush2.msra.mxu0 0.0
        %1743 = vmatprep.subr.mxu0 0.0
        %1744 = vmatpush2.msra.mxu0 0.0
        %1745 = vmatprep.subr.mxu0 0.0
        %1746 = vmatpush2.msra.mxu0 0.0
        %1747 = vmatprep.subr.mxu0 0.0
        %1748 = vmatpush2.msra.mxu0 0.0
        %1749 = vmatprep.subr.mxu0 0.0
        %1750 = vmatpush2.msra.mxu0 0.0
        %1751 = vmatprep.subr.mxu0 0.0
        %1752 = vmatpush2.msra.mxu0 0.0
        %1753 = vmatprep.mubr.f32.mxu0 0.0
        %1754 = vmatmul.mubr.f32.gmra.mxu0 %v1687
        %v1755 = vpop.f32.mrf.mxu0
        %v1756 = vadd.f32 %v1683, %v1755
        %v1757 = vpop.f32.mrf.mxu0
        %1758 = vdwg.mxu0
        %v1759 = vadd.f32 %v1756, %v1584
        %v1760 = vsel %vm638, %v1759, 0.0
        %1761 = vadd.xlane.f32.xlu0 %v1760
        %v1762 = vpop.xlane.xlu0 %1761
        %v1763 = vmul.f32 %v1762, %v1558
        %v1764 = vsub.f32 %v1759, %v1763
        %v1765 = vmul.f32 %v1764, %v1764
        %v1766 = vsel %vm638, %v1765, 0.0
        %1767 = vadd.xlane.f32.xlu0 %v1766
        %v1768 = vpop.xlane.xlu0 %1767
        %v1769 = vmul.f32 %v1768, %v1558
        %v1770 = vadd.f32 %v1769, 1e-05
        %v1771 = vrsqrt.pop %v1770
        %v1772 = vmul.f32 %v1764, %v1771
        %v1773 = vld [vmem:[%s14] sm:$0x1]
        %v1775 = vlaneseq
        %v1776 = vshrl.u32 %v1775, 7
        %v1777 = vsub.s32 0, %v1776
        %v1778 = vrot.slane %v1773, %v1777
        %v1780 = vmul.f32 %v1772, %v1778
        %v1781 = vld [vmem:[%s15] sm:$0x1]
        %v1783 = vlaneseq
        %v1784 = vshrl.u32 %v1783, 7
        %v1785 = vsub.s32 0, %v1784
        %v1786 = vrot.slane %v1781, %v1785
        %v1788 = vadd.f32 %v1780, %v1786
        %1789 = vst.msk [vmem:[%s618] sm:$0xff] %vm638, %v1788
        %s1790 = sand.u32 %s395, 1
        %s1791 = scalar_lea.sflag [#allocation4], %s1790
        %s1792 = sand.u32 %s395, 1
        %s1793 = smul.addr %s1792, 8
        %s1794 = scalar_lea.vmem [#allocation8], %s1793
        %s1795 = sand.u32 %s421, 1
        %s1796 = scalar_lea.sflag [#allocation10], %s1795
        %s1797 = sand.u32 %s421, 1
        %s1798 = smul.addr %s1797, 32
        %s1799 = scalar_lea.vmem [#allocation9], %s1798
        // Predicated region
        $region97: #{tpu_custom_call.1} parent=83 // pred_check
          %p1800 = pneg %p405
        $region98: #{tpu_custom_call.1} parent=83 // pred_check_branch
          %1802 = sbr.rel (%p1800) target = $region100
        $region99: #{tpu_custom_call.1} parent=83 // pred_region
          %s1804 = ssub.s32 128, 128
          %1805 = vsyncadd %s1791, %s1804
          %s1806 = smul.addr %s41, 128
          %s1807 = scalar_lea.hbm %s16, %s1806
          %s1809 = sshll.u32 %s1794, 4
          %s1810 = int_to_ptr.vmem [resolvable:$true] %s1809
          %1812 = dma.vmem_to_hbm [thread:$0]  %s1810, 128, %s1807, %s1791
        $region100: #{tpu_custom_call.1} parent=83 // pred_fallthru
          _
        // Predicated region
        $region101: #{tpu_custom_call.1} parent=83 // pred_check
          %p1813 = pneg %p431
        $region102: #{tpu_custom_call.1} parent=83 // pred_check_branch
          %1815 = sbr.rel (%p1813) target = $region104
        $region103: #{tpu_custom_call.1} parent=83 // pred_region
          %s1817 = ssub.s32 512, 512
          %1818 = vsyncadd %s1796, %s1817
          %s1819 = smul.addr %s41, 4
          %s1820 = smul.addr %s1819, 128
          %s1821 = scalar_lea.hbm %s17, %s1820
          %s1822 = sshll.u32 %s1799, 4
          %s1823 = int_to_ptr.vmem [resolvable:$true] %s1822
          %1828 = dma.vmem_to_hbm [thread:$0]  %s1823, 512, %s1821, %s1796, 128, 128, 8
        $region104: #{tpu_custom_call.1} parent=83 // pred_fallthru
          _
      $region84: #{tpu_custom_call.1} parent=5 // pred_fallthru
        _
      %p1829 = scmp.le.s32.totalorder 2, %s36
      // Predicated region
      $region105: #{tpu_custom_call.1} parent=5 // pred_check
        %p1830 = pneg %p1829
      $region106: #{tpu_custom_call.1} parent=5 // pred_check_branch
        %1832 = sbr.rel (%p1830) target = $region108
      $region107: #{tpu_custom_call.1} parent=5 // pred_region
        %s1833 = ssub.s32 %s36, 2
        // Predicated region
        $region109: #{tpu_custom_call.1} parent=107 // pred_check
          %p1834 = pneg %p411
        $region110: #{tpu_custom_call.1} parent=107 // pred_check_branch
          %1836 = sbr.rel (%p1834) target = $region112
        $region111: #{tpu_custom_call.1} parent=107 // pred_region
          %s1837 = sand.u32 %s396, 1
          %s1838 = scalar_lea.sflag [#allocation4], %s1837
          %s1839 = sand.u32 %s396, 1
          %s1840 = smul.addr %s1839, 8
          %s1841 = scalar_lea.vmem [#allocation8], %s1840
          %1842 = dma.done %s1838, 128
        $region112: #{tpu_custom_call.1} parent=107 // pred_fallthru
          _
        // Predicated region
        $region113: #{tpu_custom_call.1} parent=107 // pred_check
          %p1843 = pneg %p437
        $region114: #{tpu_custom_call.1} parent=107 // pred_check_branch
          %1845 = sbr.rel (%p1843) target = $region116
        $region115: #{tpu_custom_call.1} parent=107 // pred_region
          %s1846 = sand.u32 %s422, 1
          %s1847 = scalar_lea.sflag [#allocation10], %s1846
          %s1848 = sand.u32 %s422, 1
          %s1849 = smul.addr %s1848, 32
          %s1850 = scalar_lea.vmem [#allocation9], %s1849
          %1851 = dma.done %s1847, 512
        $region116: #{tpu_custom_call.1} parent=107 // pred_fallthru
          _
      $region108: #{tpu_custom_call.1} parent=5 // pred_fallthru
        _
    $region6: #{tpu_custom_call.1} parent=1 // loop_footer
      %s40 = sadd.s32 1, %s36
    $region7: #{tpu_custom_call.1} parent=1 // loop_footer_branch
      %35 = sbr.rel target = $region3
    $region8: #{tpu_custom_call.1} parent=1 // loop_exit
      _
    %1852 = vsyncpa [#allocation3], 1
    %s1853 = scalar_lea.sflag [#allocation3], 1
    %1854 = vsyncpa %s1853, 1
    %1855 = vsyncpa [#allocation6], 1
    %s1856 = scalar_lea.sflag [#allocation6], 1
    %1857 = vsyncpa %s1856, 1
    %1858 = vsyncpa [#allocation4], 1
    %s1859 = scalar_lea.sflag [#allocation4], 1
    %1860 = vsyncpa %s1859, 1
    %1861 = vsyncpa [#allocation10], 1
    %s1862 = scalar_lea.sflag [#allocation10], 1
    %1863 = vsyncpa %s1862, 1

</llo_original>
